<compile_context>
chip_gen: v5e
topology: v5e:2x2
jax: 0.10.0
libtpu: 0.0.40
codegen_flags: <defaults>
</compile_context>

<pallas_src>
import functools

import jax
import jax.numpy as jnp
from jax import lax
from jax.experimental import pallas as pl
from jax.experimental.pallas import tpu as pltpu


def _vmem_limit_bytes():
    """Generation-aware VMEM cap: ~3/4 of physical, clamped to [48, 96] MiB."""
    try:
        phys = int(pltpu.get_tpu_info().vmem_capacity_bytes)
        return max(48 * 1024 * 1024, min(96 * 1024 * 1024, (phys * 3) // 4))
    except Exception:  # pragma: no cover - conservative fallback
        return 48 * 1024 * 1024


def _pick_tile(n, pref, quantum=128):
    """Largest multiple of `quantum` that divides n and is <= pref (else full n)."""
    if n <= quantum or n % quantum != 0:
        return n
    t = min(pref, n)
    t -= t % quantum
    while n % t != 0:
        t -= quantum
    return t


# ---------------------------------------------------------------------------
# Stage A: everything that only needs x / zx (no adjacency).
#   p1 = x @ W1                      (feeds GCN layer 1)
#   zx = relu(relu(x@We1+be1)@We2+be2)
#   feat_recon = sigmoid(relu(zx@Wd1+bd1)@Wd2+bd2)
# Row-block grid over nodes, fully parallel; all weights resident, single-buffered.
# ---------------------------------------------------------------------------
def stage_a_kernel(x_ref, gc1_w_ref, me1_w_ref, me1_b_ref, me2_w_ref, me2_b_ref,
                   md1_w_ref, md1_b_ref, md2_w_ref, md2_b_ref,
                   p1_ref, zx_ref, feat_ref):
    f32 = jnp.float32
    x = x_ref[...]

    # GCN layer-1 pre-aggregation product.
    p1_ref[...] = jnp.dot(x, gc1_w_ref[...], preferred_element_type=f32)

    # MLP encoder.
    m = jnp.maximum(jnp.dot(x, me1_w_ref[...], preferred_element_type=f32)
                    + me1_b_ref[...], 0.0)
    zx = jnp.maximum(jnp.dot(m, me2_w_ref[...], preferred_element_type=f32)
                     + me2_b_ref[...], 0.0)
    zx_ref[...] = zx

    # MLP decoder on zx, then exact sigmoid.
    d = jnp.maximum(jnp.dot(zx, md1_w_ref[...], preferred_element_type=f32)
                    + md1_b_ref[...], 0.0)
    fr = jnp.dot(d, md2_w_ref[...], preferred_element_type=f32) + md2_b_ref[...]
    feat_ref[...] = 1.0 / (1.0 + jnp.exp(-fr))


# ---------------------------------------------------------------------------
# Stage B: GCN layer 1 aggregation + layer-2 pre-product.
#   acc_i = sum_k adj[i,k] @ p1[k]        (adj streamed in (tm, tk) tiles)
#   p2_i  = relu(acc_i + b1) @ W2         (at last k)
# Grid: (row blocks "parallel", k blocks "arbitrary").  p1 stays resident.
# ---------------------------------------------------------------------------
def gcn_layer1_kernel(adj_ref, p1_ref, b1_ref, w2_ref, p2_ref, acc_ref, *, tk):
    kk = pl.program_id(1)

    @pl.when(kk == 0)
    def _init():
        acc_ref[...] = jnp.zeros_like(acc_ref)

    start = pl.multiple_of(kk * tk, tk)
    p1_blk = p1_ref[pl.ds(start, tk), :]
    acc_ref[...] += jnp.dot(adj_ref[...], p1_blk, preferred_element_type=jnp.float32)

    @pl.when(kk == pl.num_programs(1) - 1)
    def _finalize():
        h = jnp.maximum(acc_ref[...] + b1_ref[...], 0.0)
        p2_ref[...] = jnp.dot(h, w2_ref[...], preferred_element_type=jnp.float32)


# ---------------------------------------------------------------------------
# Stage C: GCN layer 2 aggregation + head.
#   za_i = relu(sum_k adj[i,k] @ p2[k] + b2)
#   z_i  = [za_i | zx_i]   (disjoint lane-range stores, no concatenate)
#   pred_i = softmax(za_i @ Wp[:L] + zx_i @ Wp[L:] + bp)
# ---------------------------------------------------------------------------
def gcn_layer2_head_kernel(adj_ref, p2_ref, b2_ref, zx_ref, plw_ref, plb_ref,
                           z_ref, pred_ref, acc_ref, *, tk, latent):
    kk = pl.program_id(1)

    @pl.when(kk == 0)
    def _init():
        acc_ref[...] = jnp.zeros_like(acc_ref)

    start = pl.multiple_of(kk * tk, tk)
    p2_blk = p2_ref[pl.ds(start, tk), :]
    acc_ref[...] += jnp.dot(adj_ref[...], p2_blk, preferred_element_type=jnp.float32)

    @pl.when(kk == pl.num_programs(1) - 1)
    def _finalize():
        za = jnp.maximum(acc_ref[...] + b2_ref[...], 0.0)
        zx = zx_ref[...]
        z_ref[:, :latent] = za
        z_ref[:, latent:] = zx

        wa = plw_ref[:latent, :]
        wb = plw_ref[latent:, :]
        logits = (jnp.dot(za, wa, preferred_element_type=jnp.float32)
                  + jnp.dot(zx, wb, preferred_element_type=jnp.float32)
                  + plb_ref[...])
        lmax = jnp.max(logits, axis=1, keepdims=True)
        e = jnp.exp(logits - lmax)
        denom = jnp.sum(e, axis=1, keepdims=True)
        pred_ref[...] = e / denom


# ---------------------------------------------------------------------------
# Stage D: inner-product decoder adj_recon = z @ z.T.
# z (N x 2L) is resident in VMEM (single-buffered, fetched once); the i/j row
# bands are sliced in-kernel with pl.ds, so the only streaming traffic is the
# lane-dense (tm x tn) output tile write.
# ---------------------------------------------------------------------------
def inner_product_kernel(z_ref, out_ref, *, tm, tn):
    i = pl.program_id(0)
    j = pl.program_id(1)
    ri = pl.multiple_of(i * tm, tm)
    rj = pl.multiple_of(j * tn, tn)
    zi = z_ref[pl.ds(ri, tm), :]
    zj = z_ref[pl.ds(rj, tn), :]
    out_ref[...] = lax.dot_general(
        zi, zj,
        dimension_numbers=(((1,), (1,)), ((), ())),
        preferred_element_type=jnp.float32)


# ---------------------------------------------------------------------------
# Wrapper
# ---------------------------------------------------------------------------
def sepa_forward(x, adj, params, *, tm=None, tk=None, tn=None, tm_a=None):
    N, Fdim = x.shape
    NHID = params["gc1_w"].shape[1]
    L = params["gc2_w"].shape[1]
    C = params["pl_w"].shape[1]
    f32 = jnp.float32

    # Tile choices (review): large adj / output tiles, snapped to divisors of N.
    tm = _pick_tile(N, 512 if tm is None else tm)
    tk = _pick_tile(N, 2048 if tk is None else tk)
    tn = _pick_tile(N, 2048 if tn is None else tn)
    tm_a = _pick_tile(N, 1024 if tm_a is None else tm_a)

    vmem_limit = _vmem_limit_bytes()
    cp_par1 = pltpu.CompilerParams(dimension_semantics=("parallel",),
                                   vmem_limit_bytes=vmem_limit)
    cp_red = pltpu.CompilerParams(dimension_semantics=("parallel", "arbitrary"),
                                  vmem_limit_bytes=vmem_limit)
    cp_par2 = pltpu.CompilerParams(dimension_semantics=("parallel", "parallel"),
                                   vmem_limit_bytes=vmem_limit)

    single = pl.Buffered(1)  # constant-index resident inputs: fetch once, 1 buffer

    # ---- Stage A -----------------------------------------------------------
    p1, zx, feat_recon = pl.pallas_call(
        stage_a_kernel,
        out_shape=(jax.ShapeDtypeStruct((N, NHID), f32),
                   jax.ShapeDtypeStruct((N, L), f32),
                   jax.ShapeDtypeStruct((N, Fdim), f32)),
        grid=(N // tm_a,),
        in_specs=[
            pl.BlockSpec((tm_a, Fdim), lambda i: (i, 0)),                          # x row block
            pl.BlockSpec((Fdim, NHID), lambda i: (0, 0), pipeline_mode=single),    # gc1_w
            pl.BlockSpec((Fdim, NHID), lambda i: (0, 0), pipeline_mode=single),    # me1_w
            pl.BlockSpec((1, NHID), lambda i: (0, 0), pipeline_mode=single),       # me1_b
            pl.BlockSpec((NHID, L), lambda i: (0, 0), pipeline_mode=single),       # me2_w
            pl.BlockSpec((1, L), lambda i: (0, 0), pipeline_mode=single),          # me2_b
            pl.BlockSpec((L, NHID), lambda i: (0, 0), pipeline_mode=single),       # md1_w
            pl.BlockSpec((1, NHID), lambda i: (0, 0), pipeline_mode=single),       # md1_b
            pl.BlockSpec((NHID, Fdim), lambda i: (0, 0), pipeline_mode=single),    # md2_w
            pl.BlockSpec((1, Fdim), lambda i: (0, 0), pipeline_mode=single),       # md2_b
        ],
        out_specs=(pl.BlockSpec((tm_a, NHID), lambda i: (i, 0)),
                   pl.BlockSpec((tm_a, L), lambda i: (i, 0)),
                   pl.BlockSpec((tm_a, Fdim), lambda i: (i, 0))),
        compiler_params=cp_par1,
    )(x, params["gc1_w"], params["me1_w"], params["me1_b"],
      params["me2_w"], params["me2_b"], params["md1_w"], params["md1_b"],
      params["md2_w"], params["md2_b"])

    # ---- Stage B: GCN layer 1 (adj streamed, p1 resident) -------------------
    p2 = pl.pallas_call(
        functools.partial(gcn_layer1_kernel, tk=tk),
        out_shape=jax.ShapeDtypeStruct((N, L), f32),
        grid=(N // tm, N // tk),
        in_specs=[
            pl.BlockSpec((tm, tk), lambda i, k: (i, k)),                           # adj tile
            pl.BlockSpec((N, NHID), lambda i, k: (0, 0), pipeline_mode=single),    # p1 (resident)
            pl.BlockSpec((1, NHID), lambda i, k: (0, 0), pipeline_mode=single),    # gc1_b
            pl.BlockSpec((NHID, L), lambda i, k: (0, 0), pipeline_mode=single),    # gc2_w
        ],
        out_specs=pl.BlockSpec((tm, L), lambda i, k: (i, 0)),
        scratch_shapes=[pltpu.VMEM((tm, NHID), jnp.float32)],
        compiler_params=cp_red,
        cost_estimate=pl.CostEstimate(
            flops=int(2 * N * N * NHID + 2 * N * NHID * L),
            transcendentals=0,
            bytes_accessed=int(4 * (N * N + N * NHID + NHID * L + N * L))),
    )(adj, p1, params["gc1_b"], params["gc2_w"])

    # ---- Stage C: GCN layer 2 + z packing + class head ----------------------
    z, pred = pl.pallas_call(
        functools.partial(gcn_layer2_head_kernel, tk=tk, latent=L),
        out_shape=(jax.ShapeDtypeStruct((N, 2 * L), f32),
                   jax.ShapeDtypeStruct((N, C), f32)),
        grid=(N // tm, N // tk),
        in_specs=[
            pl.BlockSpec((tm, tk), lambda i, k: (i, k)),                           # adj tile
            pl.BlockSpec((N, L), lambda i, k: (0, 0), pipeline_mode=single),       # p2 (resident)
            pl.BlockSpec((1, L), lambda i, k: (0, 0), pipeline_mode=single),       # gc2_b
            pl.BlockSpec((tm, L), lambda i, k: (i, 0)),                            # zx row block
            pl.BlockSpec((2 * L, C), lambda i, k: (0, 0), pipeline_mode=single),   # pl_w
            pl.BlockSpec((1, C), lambda i, k: (0, 0), pipeline_mode=single),       # pl_b
        ],
        out_specs=(pl.BlockSpec((tm, 2 * L), lambda i, k: (i, 0)),
                   pl.BlockSpec((tm, C), lambda i, k: (i, 0))),
        scratch_shapes=[pltpu.VMEM((tm, L), jnp.float32)],
        compiler_params=cp_red,
        cost_estimate=pl.CostEstimate(
            flops=int(2 * N * N * L + 2 * N * 2 * L * C),
            transcendentals=int(N * C),
            bytes_accessed=int(4 * (N * N + 3 * N * L + 2 * L * C + N * (2 * L + C)))),
    )(adj, p2, params["gc2_b"], zx, params["pl_w"], params["pl_b"])

    # ---- Stage D: adj_recon = z @ z.T (resident z, lane-dense output tiles) -
    adj_recon = pl.pallas_call(
        functools.partial(inner_product_kernel, tm=tm, tn=tn),
        out_shape=jax.ShapeDtypeStruct((N, N), f32),
        grid=(N // tm, N // tn),
        in_specs=[
            pl.BlockSpec((N, 2 * L), lambda i, j: (0, 0), pipeline_mode=single),   # z (resident)
        ],
        out_specs=pl.BlockSpec((tm, tn), lambda i, j: (i, j)),
        compiler_params=cp_par2,
        cost_estimate=pl.CostEstimate(
            flops=int(2 * N * N * 2 * L),
            transcendentals=0,
            bytes_accessed=int(4 * (N * N + N * 2 * L))),
    )(z)

    return {"adj_recon": adj_recon, "feat_recon": feat_recon, "pred": pred, "z": z}


# ---------------------------------------------------------------------------
# Parameter init (Glorot-ish), weights (in, out), biases (1, out).
# ---------------------------------------------------------------------------
def init_params(key, num_features, nhid, latent_dim, num_classes):
    ks = jax.random.split(key, 8)

    def lin(k, din, dout):
        w = jax.random.normal(k, (din, dout), jnp.float32) * (1.0 / jnp.sqrt(din))
        b = jnp.zeros((1, dout), jnp.float32)
        return w, b

    gc1_w, gc1_b = lin(ks[0], num_features, nhid)
    gc2_w, gc2_b = lin(ks[1], nhid, latent_dim)
    me1_w, me1_b = lin(ks[2], num_features, nhid)
    me2_w, me2_b = lin(ks[3], nhid, latent_dim)
    md1_w, md1_b = lin(ks[4], latent_dim, nhid)
    md2_w, md2_b = lin(ks[5], nhid, num_features)
    pl_w, pl_b = lin(ks[6], 2 * latent_dim, num_classes)
    return dict(
        gc1_w=gc1_w, gc1_b=gc1_b, gc2_w=gc2_w, gc2_b=gc2_b,
        me1_w=me1_w, me1_b=me1_b, me2_w=me2_w, me2_b=me2_b,
        md1_w=md1_w, md1_b=md1_b, md2_w=md2_w, md2_b=md2_b,
        pl_w=pl_w, pl_b=pl_b,
    )


if __name__ == "__main__":
    # Small synthetic graph: N nodes, F features, nhid=32, latent_dim=16, 8 classes.
    N, F, NHID, LATENT, NCLS = 256, 32, 32, 16, 8
    key = jax.random.PRNGKey(0)
    kx, ka, kp = jax.random.split(key, 3)

    x = jax.random.normal(kx, (N, F), jnp.float32)

    # Symmetric normalized adjacency with self loops: D^-1/2 (A + I) D^-1/2.
    a = (jax.random.uniform(ka, (N, N)) < 0.05).astype(jnp.float32)
    a = jnp.maximum(a, a.T)
    a = a + jnp.eye(N, dtype=jnp.float32)
    deg = jnp.sum(a, axis=1)
    dinv = 1.0 / jnp.sqrt(deg)
    adj = a * dinv[:, None] * dinv[None, :]

    params = init_params(kp, F, NHID, LATENT, NCLS)

    out = sepa_forward(x, adj, params)
    jax.block_until_ready(out)

    # Pure-JAX reference.
    h = jnp.maximum(adj @ (x @ params["gc1_w"]) + params["gc1_b"], 0.0)
    za = jnp.maximum(adj @ (h @ params["gc2_w"]) + params["gc2_b"], 0.0)
    m = jnp.maximum(x @ params["me1_w"] + params["me1_b"], 0.0)
    zx = jnp.maximum(m @ params["me2_w"] + params["me2_b"], 0.0)
    z_ref = jnp.concatenate([za, zx], axis=1)
    pred_ref = jax.nn.softmax(z_ref @ params["pl_w"] + params["pl_b"], axis=1)
    adj_ref_o = z_ref @ z_ref.T
    d = jnp.maximum(zx @ params["md1_w"] + params["md1_b"], 0.0)
    feat_ref = jax.nn.sigmoid(d @ params["md2_w"] + params["md2_b"])

    assert jnp.allclose(out["z"], z_ref, atol=1e-3, rtol=1e-3)
    assert jnp.allclose(out["adj_recon"], adj_ref_o, atol=1e-3, rtol=1e-3)
    assert jnp.allclose(out["pred"], pred_ref, atol=1e-3, rtol=1e-3)
    assert jnp.allclose(out["feat_recon"], feat_ref, atol=1e-3, rtol=1e-3)

    print("KERNEL_OK")
</pallas_src>

<mosaic_0001>
module attributes {stable_mosaic.version = 11 : i64} {
  func.func @stage_a_kernel(%arg0: i32, %arg1: memref<256x32xf32, #tpu.memory_space<vmem>>, %arg2: memref<32x32xf32, #tpu.memory_space<vmem>>, %arg3: memref<32x32xf32, #tpu.memory_space<vmem>>, %arg4: memref<1x32xf32, #tpu.memory_space<vmem>>, %arg5: memref<32x16xf32, #tpu.memory_space<vmem>>, %arg6: memref<1x16xf32, #tpu.memory_space<vmem>>, %arg7: memref<16x32xf32, #tpu.memory_space<vmem>>, %arg8: memref<1x32xf32, #tpu.memory_space<vmem>>, %arg9: memref<32x32xf32, #tpu.memory_space<vmem>>, %arg10: memref<1x32xf32, #tpu.memory_space<vmem>>, %arg11: memref<256x32xf32, #tpu.memory_space<vmem>>, %arg12: memref<256x16xf32, #tpu.memory_space<vmem>>, %arg13: memref<256x32xf32, #tpu.memory_space<vmem>>) attributes {dimension_semantics = [#tpu.dimension_semantics<parallel>], iteration_bounds = array<i64: 1>, scalar_prefetch = 0 : i64, scratch_operands = 0 : i64, tpu.core_type = #tpu.core_type<tc>, window_params = [{transform_indices = @transform_0, window_bounds = array<i64: 256, 32>}, {pipeline_mode = #tpu.pipeline_mode<synchronous>, transform_indices = @transform_1, window_bounds = array<i64: 32, 32>}, {pipeline_mode = #tpu.pipeline_mode<synchronous>, transform_indices = @transform_2, window_bounds = array<i64: 32, 32>}, {pipeline_mode = #tpu.pipeline_mode<synchronous>, transform_indices = @transform_3, window_bounds = array<i64: 1, 32>}, {pipeline_mode = #tpu.pipeline_mode<synchronous>, transform_indices = @transform_4, window_bounds = array<i64: 32, 16>}, {pipeline_mode = #tpu.pipeline_mode<synchronous>, transform_indices = @transform_5, window_bounds = array<i64: 1, 16>}, {pipeline_mode = #tpu.pipeline_mode<synchronous>, transform_indices = @transform_6, window_bounds = array<i64: 16, 32>}, {pipeline_mode = #tpu.pipeline_mode<synchronous>, transform_indices = @transform_7, window_bounds = array<i64: 1, 32>}, {pipeline_mode = #tpu.pipeline_mode<synchronous>, transform_indices = @transform_8, window_bounds = array<i64: 32, 32>}, {pipeline_mode = #tpu.pipeline_mode<synchronous>, transform_indices = @transform_9, window_bounds = array<i64: 1, 32>}, {transform_indices = @transform_10, window_bounds = array<i64: 256, 32>}, {transform_indices = @transform_11, window_bounds = array<i64: 256, 16>}, {transform_indices = @transform_12, window_bounds = array<i64: 256, 32>}]} {
    %c0 = arith.constant 0 : index
    %c0_0 = arith.constant 0 : index
    %0 = vector.load %arg1[%c0, %c0_0] : memref<256x32xf32, #tpu.memory_space<vmem>>, vector<256x32xf32>
    %c0_1 = arith.constant 0 : index
    %c0_2 = arith.constant 0 : index
    %1 = vector.load %arg2[%c0_1, %c0_2] : memref<32x32xf32, #tpu.memory_space<vmem>>, vector<32x32xf32>
    %cst = arith.constant dense<0.000000e+00> : vector<256x32xf32>
    %2 = tpu.matmul %0, %1, %cst {dimension_numbers = #tpu.dot_dimension_numbers<[1], [0], [0], [1], [0, 0, 1, 1], [], []>} : vector<256x32xf32>, vector<32x32xf32>, vector<256x32xf32> -> vector<256x32xf32>
    %c0_3 = arith.constant 0 : index
    %c0_4 = arith.constant 0 : index
    %3 = vector.load %arg11[%c0_3, %c0_4] : memref<256x32xf32, #tpu.memory_space<vmem>>, vector<256x32xf32>
    tpu.vector_store %arg11[%c0_3, %c0_4], %2 {strides = array<i32>} : memref<256x32xf32, #tpu.memory_space<vmem>>, vector<256x32xf32>,
    %c0_5 = arith.constant 0 : index
    %c0_6 = arith.constant 0 : index
    %4 = vector.load %arg3[%c0_5, %c0_6] : memref<32x32xf32, #tpu.memory_space<vmem>>, vector<32x32xf32>
    %cst_7 = arith.constant dense<0.000000e+00> : vector<256x32xf32>
    %5 = tpu.matmul %0, %4, %cst_7 {dimension_numbers = #tpu.dot_dimension_numbers<[1], [0], [0], [1], [0, 0, 1, 1], [], []>} : vector<256x32xf32>, vector<32x32xf32>, vector<256x32xf32> -> vector<256x32xf32>
    %c0_8 = arith.constant 0 : index
    %c0_9 = arith.constant 0 : index
    %6 = vector.load %arg4[%c0_8, %c0_9] : memref<1x32xf32, #tpu.memory_space<vmem>>, vector<1x32xf32>
    %7 = vector.broadcast %6 : vector<1x32xf32> to vector<256x32xf32>
    %8 = arith.addf %5, %7 : vector<256x32xf32>
    %cst_10 = arith.constant 0.000000e+00 : f32
    %9 = vector.broadcast %cst_10 : f32 to vector<256x32xf32>
    %10 = arith.maximumf %8, %9 : vector<256x32xf32>
    %c0_11 = arith.constant 0 : index
    %c0_12 = arith.constant 0 : index
    %11 = vector.load %arg5[%c0_11, %c0_12] : memref<32x16xf32, #tpu.memory_space<vmem>>, vector<32x16xf32>
    %cst_13 = arith.constant dense<0.000000e+00> : vector<256x16xf32>
    %12 = tpu.matmul %10, %11, %cst_13 {dimension_numbers = #tpu.dot_dimension_numbers<[1], [0], [0], [1], [0, 0, 1, 1], [], []>} : vector<256x32xf32>, vector<32x16xf32>, vector<256x16xf32> -> vector<256x16xf32>
    %c0_14 = arith.constant 0 : index
    %c0_15 = arith.constant 0 : index
    %13 = vector.load %arg6[%c0_14, %c0_15] : memref<1x16xf32, #tpu.memory_space<vmem>>, vector<1x16xf32>
    %14 = vector.broadcast %13 : vector<1x16xf32> to vector<256x16xf32>
    %15 = arith.addf %12, %14 : vector<256x16xf32>
    %cst_16 = arith.constant 0.000000e+00 : f32
    %16 = vector.broadcast %cst_16 : f32 to vector<256x16xf32>
    %17 = arith.maximumf %15, %16 : vector<256x16xf32>
    %c0_17 = arith.constant 0 : index
    %c0_18 = arith.constant 0 : index
    %18 = vector.load %arg12[%c0_17, %c0_18] : memref<256x16xf32, #tpu.memory_space<vmem>>, vector<256x16xf32>
    tpu.vector_store %arg12[%c0_17, %c0_18], %17 {strides = array<i32>} : memref<256x16xf32, #tpu.memory_space<vmem>>, vector<256x16xf32>,
    %c0_19 = arith.constant 0 : index
    %c0_20 = arith.constant 0 : index
    %19 = vector.load %arg7[%c0_19, %c0_20] : memref<16x32xf32, #tpu.memory_space<vmem>>, vector<16x32xf32>
    %cst_21 = arith.constant dense<0.000000e+00> : vector<256x32xf32>
    %20 = tpu.matmul %17, %19, %cst_21 {dimension_numbers = #tpu.dot_dimension_numbers<[1], [0], [0], [1], [0, 0, 1, 1], [], []>} : vector<256x16xf32>, vector<16x32xf32>, vector<256x32xf32> -> vector<256x32xf32>
    %c0_22 = arith.constant 0 : index
    %c0_23 = arith.constant 0 : index
    %21 = vector.load %arg8[%c0_22, %c0_23] : memref<1x32xf32, #tpu.memory_space<vmem>>, vector<1x32xf32>
    %22 = vector.broadcast %21 : vector<1x32xf32> to vector<256x32xf32>
    %23 = arith.addf %20, %22 : vector<256x32xf32>
    %cst_24 = arith.constant 0.000000e+00 : f32
    %24 = vector.broadcast %cst_24 : f32 to vector<256x32xf32>
    %25 = arith.maximumf %23, %24 : vector<256x32xf32>
    %c0_25 = arith.constant 0 : index
    %c0_26 = arith.constant 0 : index
    %26 = vector.load %arg9[%c0_25, %c0_26] : memref<32x32xf32, #tpu.memory_space<vmem>>, vector<32x32xf32>
    %cst_27 = arith.constant dense<0.000000e+00> : vector<256x32xf32>
    %27 = tpu.matmul %25, %26, %cst_27 {dimension_numbers = #tpu.dot_dimension_numbers<[1], [0], [0], [1], [0, 0, 1, 1], [], []>} : vector<256x32xf32>, vector<32x32xf32>, vector<256x32xf32> -> vector<256x32xf32>
    %c0_28 = arith.constant 0 : index
    %c0_29 = arith.constant 0 : index
    %28 = vector.load %arg10[%c0_28, %c0_29] : memref<1x32xf32, #tpu.memory_space<vmem>>, vector<1x32xf32>
    %29 = vector.broadcast %28 : vector<1x32xf32> to vector<256x32xf32>
    %30 = arith.addf %27, %29 : vector<256x32xf32>
    %cst_30 = arith.constant 0.000000e+00 : f32
    %31 = vector.broadcast %cst_30 : f32 to vector<256x32xf32>
    %32 = arith.subf %31, %30 : vector<256x32xf32>
    %33 = math.exp %32 : vector<256x32xf32>
    %cst_31 = arith.constant 1.000000e+00 : f32
    %34 = vector.broadcast %cst_31 : f32 to vector<256x32xf32>
    %35 = arith.addf %34, %33 : vector<256x32xf32>
    %cst_32 = arith.constant 1.000000e+00 : f32
    %36 = vector.broadcast %cst_32 : f32 to vector<256x32xf32>
    %37 = arith.divf %36, %35 : vector<256x32xf32>
    %c0_33 = arith.constant 0 : index
    %c0_34 = arith.constant 0 : index
    %38 = vector.load %arg13[%c0_33, %c0_34] : memref<256x32xf32, #tpu.memory_space<vmem>>, vector<256x32xf32>
    tpu.vector_store %arg13[%c0_33, %c0_34], %37 {strides = array<i32>} : memref<256x32xf32, #tpu.memory_space<vmem>>, vector<256x32xf32>,
    return
  }
  func.func @transform_0(%arg0: i32) -> (i32, i32) {
    %c0_i32 = arith.constant 0 : i32
    %c0_i32_0 = arith.constant 0 : i32
    return %arg0, %c0_i32 : i32, i32
  }
  func.func @transform_1(%arg0: i32) -> (i32, i32) {
    %c0_i32 = arith.constant 0 : i32
    %c0_i32_0 = arith.constant 0 : i32
    %c0_i32_1 = arith.constant 0 : i32
    return %c0_i32, %c0_i32_0 : i32, i32
  }
  func.func @transform_2(%arg0: i32) -> (i32, i32) {
    %c0_i32 = arith.constant 0 : i32
    %c0_i32_0 = arith.constant 0 : i32
    %c0_i32_1 = arith.constant 0 : i32
    return %c0_i32, %c0_i32_0 : i32, i32
  }
  func.func @transform_3(%arg0: i32) -> (i32, i32) {
    %c0_i32 = arith.constant 0 : i32
    %c0_i32_0 = arith.constant 0 : i32
    %c0_i32_1 = arith.constant 0 : i32
    return %c0_i32, %c0_i32_0 : i32, i32
  }
  func.func @transform_4(%arg0: i32) -> (i32, i32) {
    %c0_i32 = arith.constant 0 : i32
    %c0_i32_0 = arith.constant 0 : i32
    %c0_i32_1 = arith.constant 0 : i32
    return %c0_i32, %c0_i32_0 : i32, i32
  }
  func.func @transform_5(%arg0: i32) -> (i32, i32) {
    %c0_i32 = arith.constant 0 : i32
    %c0_i32_0 = arith.constant 0 : i32
    %c0_i32_1 = arith.constant 0 : i32
    return %c0_i32, %c0_i32_0 : i32, i32
  }
  func.func @transform_6(%arg0: i32) -> (i32, i32) {
    %c0_i32 = arith.constant 0 : i32
    %c0_i32_0 = arith.constant 0 : i32
    %c0_i32_1 = arith.constant 0 : i32
    return %c0_i32, %c0_i32_0 : i32, i32
  }
  func.func @transform_7(%arg0: i32) -> (i32, i32) {
    %c0_i32 = arith.constant 0 : i32
    %c0_i32_0 = arith.constant 0 : i32
    %c0_i32_1 = arith.constant 0 : i32
    return %c0_i32, %c0_i32_0 : i32, i32
  }
  func.func @transform_8(%arg0: i32) -> (i32, i32) {
    %c0_i32 = arith.constant 0 : i32
    %c0_i32_0 = arith.constant 0 : i32
    %c0_i32_1 = arith.constant 0 : i32
    return %c0_i32, %c0_i32_0 : i32, i32
  }
  func.func @transform_9(%arg0: i32) -> (i32, i32) {
    %c0_i32 = arith.constant 0 : i32
    %c0_i32_0 = arith.constant 0 : i32
    %c0_i32_1 = arith.constant 0 : i32
    return %c0_i32, %c0_i32_0 : i32, i32
  }
  func.func @transform_10(%arg0: i32) -> (i32, i32) {
    %c0_i32 = arith.constant 0 : i32
    %c0_i32_0 = arith.constant 0 : i32
    return %arg0, %c0_i32 : i32, i32
  }
  func.func @transform_11(%arg0: i32) -> (i32, i32) {
    %c0_i32 = arith.constant 0 : i32
    %c0_i32_0 = arith.constant 0 : i32
    return %arg0, %c0_i32 : i32, i32
  }
  func.func @transform_12(%arg0: i32) -> (i32, i32) {
    %c0_i32 = arith.constant 0 : i32
    %c0_i32_0 = arith.constant 0 : i32
    return %arg0, %c0_i32 : i32, i32
  }
}

</mosaic_0001>

<llo_original>
// kernel: tpu_custom_call.1
$region0: #{tpu_custom_call.1}
  #allocation0 [shape = 'u32[]', space=smem, size = 0x4, offset = 0x4, fixed_abs, tag = 'smem constant byte address 0x4 - core index']
  #allocation1 [shape = 'u32[72,128]{1,0:T(1,128)}', space=vmem, size = 0x9000, scoped, tag = 'internal scratch']
  %s0 = inlined_call_operand.vmem [shape: f32[256,32], index: 0, kind: input, shape index: {}]
  %s1 = inlined_call_operand.vmem [shape: f32[32,32], index: 1, kind: input, shape index: {}]
  %s2 = inlined_call_operand.vmem [shape: f32[32,32], index: 2, kind: input, shape index: {}]
  %s3 = inlined_call_operand.vmem [shape: f32[1,32], index: 3, kind: input, shape index: {}]
  %s4 = inlined_call_operand.vmem [shape: f32[32,16], index: 4, kind: input, shape index: {}]
  %s5 = inlined_call_operand.vmem [shape: f32[1,16], index: 5, kind: input, shape index: {}]
  %s6 = inlined_call_operand.vmem [shape: f32[16,32], index: 6, kind: input, shape index: {}]
  %s7 = inlined_call_operand.vmem [shape: f32[1,32], index: 7, kind: input, shape index: {}]
  %s8 = inlined_call_operand.vmem [shape: f32[32,32], index: 8, kind: input, shape index: {}]
  %s9 = inlined_call_operand.vmem [shape: f32[1,32], index: 9, kind: input, shape index: {}]
  %s10 = inlined_call_operand.vmem [shape: f32[256,32], index: 10, kind: output, shape index: {0}]
  %s11 = inlined_call_operand.vmem [shape: f32[256,16], index: 11, kind: output, shape index: {1}]
  %s12 = inlined_call_operand.vmem [shape: f32[256,32], index: 12, kind: output, shape index: {2}]
  %13 = xla_tuple %s10, %s11, %s12
  %s14 = sld [smem:[#allocation0]]
  $region66: #{tpu_custom_call.1} parent=0
    _
  %s16 = ssub.s32 1, %s14
  %s17 = scalar_select 0, %s16, %s14
  // Predicated region
  $region2: #{tpu_custom_call.1} parent=0 // pred_check
    _
  $region3: #{tpu_custom_call.1} parent=0 // pred_check_branch
    %19 = sbr.rel (0) target = $region5
  $region4: #{tpu_custom_call.1} parent=0 // pred_region
    _
  $region5: #{tpu_custom_call.1} parent=0 // pred_fallthru
    _
  // Predicated region
  $region6: #{tpu_custom_call.1} parent=0 // pred_check
    _
  $region7: #{tpu_custom_call.1} parent=0 // pred_check_branch
    %21 = sbr.rel (0) target = $region9
  $region8: #{tpu_custom_call.1} parent=0 // pred_region
    _
  $region9: #{tpu_custom_call.1} parent=0 // pred_fallthru
    _
  // Predicated region
  $region10: #{tpu_custom_call.1} parent=0 // pred_check
    _
  $region11: #{tpu_custom_call.1} parent=0 // pred_check_branch
    %23 = sbr.rel (0) target = $region13
  $region12: #{tpu_custom_call.1} parent=0 // pred_region
    _
  $region13: #{tpu_custom_call.1} parent=0 // pred_fallthru
    _
  // Predicated region
  $region14: #{tpu_custom_call.1} parent=0 // pred_check
    _
  $region15: #{tpu_custom_call.1} parent=0 // pred_check_branch
    %25 = sbr.rel (0) target = $region17
  $region16: #{tpu_custom_call.1} parent=0 // pred_region
    _
  $region17: #{tpu_custom_call.1} parent=0 // pred_fallthru
    _
  // Predicated region
  $region18: #{tpu_custom_call.1} parent=0 // pred_check
    _
  $region19: #{tpu_custom_call.1} parent=0 // pred_check_branch
    %27 = sbr.rel (0) target = $region21
  $region20: #{tpu_custom_call.1} parent=0 // pred_region
    _
  $region21: #{tpu_custom_call.1} parent=0 // pred_fallthru
    _
  // Predicated region
  $region22: #{tpu_custom_call.1} parent=0 // pred_check
    _
  $region23: #{tpu_custom_call.1} parent=0 // pred_check_branch
    %29 = sbr.rel (0) target = $region25
  $region24: #{tpu_custom_call.1} parent=0 // pred_region
    _
  $region25: #{tpu_custom_call.1} parent=0 // pred_fallthru
    _
  // Predicated region
  $region26: #{tpu_custom_call.1} parent=0 // pred_check
    _
  $region27: #{tpu_custom_call.1} parent=0 // pred_check_branch
    %31 = sbr.rel (0) target = $region29
  $region28: #{tpu_custom_call.1} parent=0 // pred_region
    _
  $region29: #{tpu_custom_call.1} parent=0 // pred_fallthru
    _
  // Predicated region
  $region30: #{tpu_custom_call.1} parent=0 // pred_check
    _
  $region31: #{tpu_custom_call.1} parent=0 // pred_check_branch
    %33 = sbr.rel (0) target = $region33
  $region32: #{tpu_custom_call.1} parent=0 // pred_region
    _
  $region33: #{tpu_custom_call.1} parent=0 // pred_fallthru
    _
  // Predicated region
  $region34: #{tpu_custom_call.1} parent=0 // pred_check
    _
  $region35: #{tpu_custom_call.1} parent=0 // pred_check_branch
    %35 = sbr.rel (0) target = $region37
  $region36: #{tpu_custom_call.1} parent=0 // pred_region
    _
  $region37: #{tpu_custom_call.1} parent=0 // pred_fallthru
    _
  // Predicated region
  $region38: #{tpu_custom_call.1} parent=0 // pred_check
    _
  $region39: #{tpu_custom_call.1} parent=0 // pred_check_branch
    %37 = sbr.rel (0) target = $region41
  $region40: #{tpu_custom_call.1} parent=0 // pred_region
    _
  $region41: #{tpu_custom_call.1} parent=0 // pred_fallthru
    _
  %v38 = vld [vmem:[%s0] sm:$0xff]
  %v39 = vld [vmem:[%s0 + $0x8] sm:$0xff]
  %v40 = vld [vmem:[%s0 + $0x10] sm:$0xff]
  %v41 = vld [vmem:[%s0 + $0x18] sm:$0xff]
  %v42 = vld [vmem:[%s0 + $0x20] sm:$0xff]
  %v43 = vld [vmem:[%s0 + $0x28] sm:$0xff]
  %v44 = vld [vmem:[%s0 + $0x30] sm:$0xff]
  %v45 = vld [vmem:[%s0 + $0x38] sm:$0xff]
  %v46 = vld [vmem:[%s0 + $0x40] sm:$0xff]
  %v47 = vld [vmem:[%s0 + $0x48] sm:$0xff]
  %v48 = vld [vmem:[%s0 + $0x50] sm:$0xff]
  %v49 = vld [vmem:[%s0 + $0x58] sm:$0xff]
  %v50 = vld [vmem:[%s0 + $0x60] sm:$0xff]
  %v51 = vld [vmem:[%s0 + $0x68] sm:$0xff]
  %v52 = vld [vmem:[%s0 + $0x70] sm:$0xff]
  %v53 = vld [vmem:[%s0 + $0x78] sm:$0xff]
  %v54 = vld [vmem:[%s0 + $0x80] sm:$0xff]
  %v55 = vld [vmem:[%s0 + $0x88] sm:$0xff]
  %v56 = vld [vmem:[%s0 + $0x90] sm:$0xff]
  %v57 = vld [vmem:[%s0 + $0x98] sm:$0xff]
  %v58 = vld [vmem:[%s0 + $0xa0] sm:$0xff]
  %v59 = vld [vmem:[%s0 + $0xa8] sm:$0xff]
  %v60 = vld [vmem:[%s0 + $0xb0] sm:$0xff]
  %v61 = vld [vmem:[%s0 + $0xb8] sm:$0xff]
  %v62 = vld [vmem:[%s0 + $0xc0] sm:$0xff]
  %v63 = vld [vmem:[%s0 + $0xc8] sm:$0xff]
  %v64 = vld [vmem:[%s0 + $0xd0] sm:$0xff]
  %v65 = vld [vmem:[%s0 + $0xd8] sm:$0xff]
  %v66 = vld [vmem:[%s0 + $0xe0] sm:$0xff]
  %v67 = vld [vmem:[%s0 + $0xe8] sm:$0xff]
  %v68 = vld [vmem:[%s0 + $0xf0] sm:$0xff]
  %v69 = vld [vmem:[%s0 + $0xf8] sm:$0xff]
  %v70 = vld [vmem:[%s1] sm:$0xff]
  %v71 = vld [vmem:[%s1 + $0x8] sm:$0xff]
  %v72 = vld [vmem:[%s1 + $0x10] sm:$0xff]
  %v73 = vld [vmem:[%s1 + $0x18] sm:$0xff]
  %vm74 = vcmask 261120
  %v76 = vsel %vm74, %v38, 0
  %v79 = vsel %vm74, %v39, 0
  %v82 = vsel %vm74, %v40, 0
  %v85 = vsel %vm74, %v41, 0
  %v88 = vsel %vm74, %v42, 0
  %v91 = vsel %vm74, %v43, 0
  %v94 = vsel %vm74, %v44, 0
  %v97 = vsel %vm74, %v45, 0
  %v100 = vsel %vm74, %v46, 0
  %v103 = vsel %vm74, %v47, 0
  %v106 = vsel %vm74, %v48, 0
  %v109 = vsel %vm74, %v49, 0
  %v112 = vsel %vm74, %v50, 0
  %v115 = vsel %vm74, %v51, 0
  %v118 = vsel %vm74, %v52, 0
  %v121 = vsel %vm74, %v53, 0
  %v124 = vsel %vm74, %v54, 0
  %v127 = vsel %vm74, %v55, 0
  %v130 = vsel %vm74, %v56, 0
  %v133 = vsel %vm74, %v57, 0
  %v136 = vsel %vm74, %v58, 0
  %v139 = vsel %vm74, %v59, 0
  %v142 = vsel %vm74, %v60, 0
  %v145 = vsel %vm74, %v61, 0
  %v148 = vsel %vm74, %v62, 0
  %v151 = vsel %vm74, %v63, 0
  %v154 = vsel %vm74, %v64, 0
  %v157 = vsel %vm74, %v65, 0
  %v160 = vsel %vm74, %v66, 0
  %v163 = vsel %vm74, %v67, 0
  %v166 = vsel %vm74, %v68, 0
  %v169 = vsel %vm74, %v69, 0
  %171 = vmatpush.msra.mxu0 0.0
  %172 = vmatpush.msra.mxu0 0.0
  %173 = vmatpush.msra.mxu0 0.0
  %174 = vmatpush.msra.mxu0 0.0
  %175 = vmatpush.msra.mxu0 0.0
  %176 = vmatpush.msra.mxu0 0.0
  %177 = vmatpush.msra.mxu0 0.0
  %178 = vmatpush.msra.mxu0 0.0
  %179 = vmatpush.msra.mxu0 0.0
  %180 = vmatpush.msra.mxu0 0.0
  %181 = vmatpush.msra.mxu0 0.0
  %182 = vmatpush.msra.mxu0 0.0
  %183 = vmatpush.msra.mxu0 %v73
  %184 = vmatpush.msra.mxu0 %v72
  %185 = vmatpush.msra.mxu0 %v71
  %186 = vmatpush.msra.mxu0 %v70
  %187 = vmatmul.f32.gmra.mxu0 %v76
  %v188 = vpop.f32.mrf.mxu0
  %v189 = vadd.f32 0.0, %v188
  %190 = vmatmul.f32.gmra.mxu0 %v79
  %v191 = vpop.f32.mrf.mxu0
  %v192 = vadd.f32 0.0, %v191
  %193 = vmatmul.f32.gmra.mxu0 %v82
  %v194 = vpop.f32.mrf.mxu0
  %v195 = vadd.f32 0.0, %v194
  %196 = vmatmul.f32.gmra.mxu0 %v85
  %v197 = vpop.f32.mrf.mxu0
  %v198 = vadd.f32 0.0, %v197
  %199 = vmatmul.f32.gmra.mxu0 %v88
  %v200 = vpop.f32.mrf.mxu0
  %v201 = vadd.f32 0.0, %v200
  %202 = vmatmul.f32.gmra.mxu0 %v91
  %v203 = vpop.f32.mrf.mxu0
  %v204 = vadd.f32 0.0, %v203
  %205 = vmatmul.f32.gmra.mxu0 %v94
  %v206 = vpop.f32.mrf.mxu0
  %v207 = vadd.f32 0.0, %v206
  %208 = vmatmul.f32.gmra.mxu0 %v97
  %v209 = vpop.f32.mrf.mxu0
  %v210 = vadd.f32 0.0, %v209
  %211 = vmatmul.f32.gmra.mxu0 %v100
  %v212 = vpop.f32.mrf.mxu0
  %v213 = vadd.f32 0.0, %v212
  %214 = vmatmul.f32.gmra.mxu0 %v103
  %v215 = vpop.f32.mrf.mxu0
  %v216 = vadd.f32 0.0, %v215
  %217 = vmatmul.f32.gmra.mxu0 %v106
  %v218 = vpop.f32.mrf.mxu0
  %v219 = vadd.f32 0.0, %v218
  %220 = vmatmul.f32.gmra.mxu0 %v109
  %v221 = vpop.f32.mrf.mxu0
  %v222 = vadd.f32 0.0, %v221
  %223 = vmatmul.f32.gmra.mxu0 %v112
  %v224 = vpop.f32.mrf.mxu0
  %v225 = vadd.f32 0.0, %v224
  %226 = vmatmul.f32.gmra.mxu0 %v115
  %v227 = vpop.f32.mrf.mxu0
  %v228 = vadd.f32 0.0, %v227
  %229 = vmatmul.f32.gmra.mxu0 %v118
  %v230 = vpop.f32.mrf.mxu0
  %v231 = vadd.f32 0.0, %v230
  %232 = vmatmul.f32.gmra.mxu0 %v121
  %v233 = vpop.f32.mrf.mxu0
  %v234 = vadd.f32 0.0, %v233
  %235 = vmatmul.f32.gmra.mxu0 %v124
  %v236 = vpop.f32.mrf.mxu0
  %v237 = vadd.f32 0.0, %v236
  %238 = vmatmul.f32.gmra.mxu0 %v127
  %v239 = vpop.f32.mrf.mxu0
  %v240 = vadd.f32 0.0, %v239
  %241 = vmatmul.f32.gmra.mxu0 %v130
  %v242 = vpop.f32.mrf.mxu0
  %v243 = vadd.f32 0.0, %v242
  %244 = vmatmul.f32.gmra.mxu0 %v133
  %v245 = vpop.f32.mrf.mxu0
  %v246 = vadd.f32 0.0, %v245
  %247 = vmatmul.f32.gmra.mxu0 %v136
  %v248 = vpop.f32.mrf.mxu0
  %v249 = vadd.f32 0.0, %v248
  %250 = vmatmul.f32.gmra.mxu0 %v139
  %v251 = vpop.f32.mrf.mxu0
  %v252 = vadd.f32 0.0, %v251
  %253 = vmatmul.f32.gmra.mxu0 %v142
  %v254 = vpop.f32.mrf.mxu0
  %v255 = vadd.f32 0.0, %v254
  %256 = vmatmul.f32.gmra.mxu0 %v145
  %v257 = vpop.f32.mrf.mxu0
  %v258 = vadd.f32 0.0, %v257
  %259 = vmatmul.f32.gmra.mxu0 %v148
  %v260 = vpop.f32.mrf.mxu0
  %v261 = vadd.f32 0.0, %v260
  %262 = vmatmul.f32.gmra.mxu0 %v151
  %v263 = vpop.f32.mrf.mxu0
  %v264 = vadd.f32 0.0, %v263
  %265 = vmatmul.f32.gmra.mxu0 %v154
  %v266 = vpop.f32.mrf.mxu0
  %v267 = vadd.f32 0.0, %v266
  %268 = vmatmul.f32.gmra.mxu0 %v157
  %v269 = vpop.f32.mrf.mxu0
  %v270 = vadd.f32 0.0, %v269
  %271 = vmatmul.f32.gmra.mxu0 %v160
  %v272 = vpop.f32.mrf.mxu0
  %v273 = vadd.f32 0.0, %v272
  %274 = vmatmul.f32.gmra.mxu0 %v163
  %v275 = vpop.f32.mrf.mxu0
  %v276 = vadd.f32 0.0, %v275
  %277 = vmatmul.f32.gmra.mxu0 %v166
  %v278 = vpop.f32.mrf.mxu0
  %v279 = vadd.f32 0.0, %v278
  %280 = vmatmul.f32.gmra.mxu0 %v169
  %v281 = vpop.f32.mrf.mxu0
  %v282 = vadd.f32 0.0, %v281
  %283 = vdwg.mxu0
  %284 = vst.msk [vmem:[%s10] sm:$0xff] %vm74, %v189
  %285 = vst.msk [vmem:[%s10 + $0x8] sm:$0xff] %vm74, %v192
  %286 = vst.msk [vmem:[%s10 + $0x10] sm:$0xff] %vm74, %v195
  %287 = vst.msk [vmem:[%s10 + $0x18] sm:$0xff] %vm74, %v198
  %288 = vst.msk [vmem:[%s10 + $0x20] sm:$0xff] %vm74, %v201
  %289 = vst.msk [vmem:[%s10 + $0x28] sm:$0xff] %vm74, %v204
  %290 = vst.msk [vmem:[%s10 + $0x30] sm:$0xff] %vm74, %v207
  %291 = vst.msk [vmem:[%s10 + $0x38] sm:$0xff] %vm74, %v210
  %292 = vst.msk [vmem:[%s10 + $0x40] sm:$0xff] %vm74, %v213
  %293 = vst.msk [vmem:[%s10 + $0x48] sm:$0xff] %vm74, %v216
  %294 = vst.msk [vmem:[%s10 + $0x50] sm:$0xff] %vm74, %v219
  %295 = vst.msk [vmem:[%s10 + $0x58] sm:$0xff] %vm74, %v222
  %296 = vst.msk [vmem:[%s10 + $0x60] sm:$0xff] %vm74, %v225
  %297 = vst.msk [vmem:[%s10 + $0x68] sm:$0xff] %vm74, %v228
  %298 = vst.msk [vmem:[%s10 + $0x70] sm:$0xff] %vm74, %v231
  %299 = vst.msk [vmem:[%s10 + $0x78] sm:$0xff] %vm74, %v234
  %300 = vst.msk [vmem:[%s10 + $0x80] sm:$0xff] %vm74, %v237
  %301 = vst.msk [vmem:[%s10 + $0x88] sm:$0xff] %vm74, %v240
  %302 = vst.msk [vmem:[%s10 + $0x90] sm:$0xff] %vm74, %v243
  %303 = vst.msk [vmem:[%s10 + $0x98] sm:$0xff] %vm74, %v246
  %304 = vst.msk [vmem:[%s10 + $0xa0] sm:$0xff] %vm74, %v249
  %305 = vst.msk [vmem:[%s10 + $0xa8] sm:$0xff] %vm74, %v252
  %306 = vst.msk [vmem:[%s10 + $0xb0] sm:$0xff] %vm74, %v255
  %307 = vst.msk [vmem:[%s10 + $0xb8] sm:$0xff] %vm74, %v258
  %308 = vst.msk [vmem:[%s10 + $0xc0] sm:$0xff] %vm74, %v261
  %309 = vst.msk [vmem:[%s10 + $0xc8] sm:$0xff] %vm74, %v264
  %310 = vst.msk [vmem:[%s10 + $0xd0] sm:$0xff] %vm74, %v267
  %311 = vst.msk [vmem:[%s10 + $0xd8] sm:$0xff] %vm74, %v270
  %312 = vst.msk [vmem:[%s10 + $0xe0] sm:$0xff] %vm74, %v273
  %313 = vst.msk [vmem:[%s10 + $0xe8] sm:$0xff] %vm74, %v276
  %314 = vst.msk [vmem:[%s10 + $0xf0] sm:$0xff] %vm74, %v279
  %315 = vst.msk [vmem:[%s10 + $0xf8] sm:$0xff] %vm74, %v282
  %v316 = vld [vmem:[%s2] sm:$0xff]
  %v317 = vld [vmem:[%s2 + $0x8] sm:$0xff]
  %v318 = vld [vmem:[%s2 + $0x10] sm:$0xff]
  %v319 = vld [vmem:[%s2 + $0x18] sm:$0xff]
  %v320 = vld [vmem:[%s3] sm:$0x1]
  %v322 = vperm.slane %v320, 0
  %324 = vmatpush.msra.mxu0 0.0
  %325 = vmatpush.msra.mxu0 0.0
  %326 = vmatpush.msra.mxu0 0.0
  %327 = vmatpush.msra.mxu0 0.0
  %328 = vmatpush.msra.mxu0 0.0
  %329 = vmatpush.msra.mxu0 0.0
  %330 = vmatpush.msra.mxu0 0.0
  %331 = vmatpush.msra.mxu0 0.0
  %332 = vmatpush.msra.mxu0 0.0
  %333 = vmatpush.msra.mxu0 0.0
  %334 = vmatpush.msra.mxu0 0.0
  %335 = vmatpush.msra.mxu0 0.0
  %336 = vmatpush.msra.mxu0 %v319
  %337 = vmatpush.msra.mxu0 %v318
  %338 = vmatpush.msra.mxu0 %v317
  %339 = vmatpush.msra.mxu0 %v316
  %340 = vmatmul.f32.gmra.mxu0 %v76
  %v341 = vpop.f32.mrf.mxu0
  %v342 = vadd.f32 %v322, %v341
  %343 = vmatmul.f32.gmra.mxu0 %v79
  %v344 = vpop.f32.mrf.mxu0
  %v345 = vadd.f32 %v322, %v344
  %346 = vmatmul.f32.gmra.mxu0 %v82
  %v347 = vpop.f32.mrf.mxu0
  %v348 = vadd.f32 %v322, %v347
  %349 = vmatmul.f32.gmra.mxu0 %v85
  %v350 = vpop.f32.mrf.mxu0
  %v351 = vadd.f32 %v322, %v350
  %352 = vmatmul.f32.gmra.mxu0 %v88
  %v353 = vpop.f32.mrf.mxu0
  %v354 = vadd.f32 %v322, %v353
  %355 = vmatmul.f32.gmra.mxu0 %v91
  %v356 = vpop.f32.mrf.mxu0
  %v357 = vadd.f32 %v322, %v356
  %358 = vmatmul.f32.gmra.mxu0 %v94
  %v359 = vpop.f32.mrf.mxu0
  %v360 = vadd.f32 %v322, %v359
  %361 = vmatmul.f32.gmra.mxu0 %v97
  %v362 = vpop.f32.mrf.mxu0
  %v363 = vadd.f32 %v322, %v362
  %364 = vmatmul.f32.gmra.mxu0 %v100
  %v365 = vpop.f32.mrf.mxu0
  %v366 = vadd.f32 %v322, %v365
  %367 = vmatmul.f32.gmra.mxu0 %v103
  %v368 = vpop.f32.mrf.mxu0
  %v369 = vadd.f32 %v322, %v368
  %370 = vmatmul.f32.gmra.mxu0 %v106
  %v371 = vpop.f32.mrf.mxu0
  %v372 = vadd.f32 %v322, %v371
  %373 = vmatmul.f32.gmra.mxu0 %v109
  %v374 = vpop.f32.mrf.mxu0
  %v375 = vadd.f32 %v322, %v374
  %376 = vmatmul.f32.gmra.mxu0 %v112
  %v377 = vpop.f32.mrf.mxu0
  %v378 = vadd.f32 %v322, %v377
  %379 = vmatmul.f32.gmra.mxu0 %v115
  %v380 = vpop.f32.mrf.mxu0
  %v381 = vadd.f32 %v322, %v380
  %382 = vmatmul.f32.gmra.mxu0 %v118
  %v383 = vpop.f32.mrf.mxu0
  %v384 = vadd.f32 %v322, %v383
  %385 = vmatmul.f32.gmra.mxu0 %v121
  %v386 = vpop.f32.mrf.mxu0
  %v387 = vadd.f32 %v322, %v386
  %388 = vmatmul.f32.gmra.mxu0 %v124
  %v389 = vpop.f32.mrf.mxu0
  %v390 = vadd.f32 %v322, %v389
  %391 = vmatmul.f32.gmra.mxu0 %v127
  %v392 = vpop.f32.mrf.mxu0
  %v393 = vadd.f32 %v322, %v392
  %394 = vmatmul.f32.gmra.mxu0 %v130
  %v395 = vpop.f32.mrf.mxu0
  %v396 = vadd.f32 %v322, %v395
  %397 = vmatmul.f32.gmra.mxu0 %v133
  %v398 = vpop.f32.mrf.mxu0
  %v399 = vadd.f32 %v322, %v398
  %400 = vmatmul.f32.gmra.mxu0 %v136
  %v401 = vpop.f32.mrf.mxu0
  %v402 = vadd.f32 %v322, %v401
  %403 = vmatmul.f32.gmra.mxu0 %v139
  %v404 = vpop.f32.mrf.mxu0
  %v405 = vadd.f32 %v322, %v404
  %406 = vmatmul.f32.gmra.mxu0 %v142
  %v407 = vpop.f32.mrf.mxu0
  %v408 = vadd.f32 %v322, %v407
  %409 = vmatmul.f32.gmra.mxu0 %v145
  %v410 = vpop.f32.mrf.mxu0
  %v411 = vadd.f32 %v322, %v410
  %412 = vmatmul.f32.gmra.mxu0 %v148
  %v413 = vpop.f32.mrf.mxu0
  %v414 = vadd.f32 %v322, %v413
  %415 = vmatmul.f32.gmra.mxu0 %v151
  %v416 = vpop.f32.mrf.mxu0
  %v417 = vadd.f32 %v322, %v416
  %418 = vmatmul.f32.gmra.mxu0 %v154
  %v419 = vpop.f32.mrf.mxu0
  %v420 = vadd.f32 %v322, %v419
  %421 = vmatmul.f32.gmra.mxu0 %v157
  %v422 = vpop.f32.mrf.mxu0
  %v423 = vadd.f32 %v322, %v422
  %424 = vmatmul.f32.gmra.mxu0 %v160
  %v425 = vpop.f32.mrf.mxu0
  %v426 = vadd.f32 %v322, %v425
  %427 = vmatmul.f32.gmra.mxu0 %v163
  %v428 = vpop.f32.mrf.mxu0
  %v429 = vadd.f32 %v322, %v428
  %430 = vmatmul.f32.gmra.mxu0 %v166
  %v431 = vpop.f32.mrf.mxu0
  %v432 = vadd.f32 %v322, %v431
  %433 = vmatmul.f32.gmra.mxu0 %v169
  %v434 = vpop.f32.mrf.mxu0
  %v435 = vadd.f32 %v322, %v434
  %436 = vdwg.mxu0
  %v437 = vmax.f32 %v342, 0.0
  %v438 = vmax.f32 %v345, 0.0
  %v439 = vmax.f32 %v348, 0.0
  %v440 = vmax.f32 %v351, 0.0
  %v441 = vmax.f32 %v354, 0.0
  %v442 = vmax.f32 %v357, 0.0
  %v443 = vmax.f32 %v360, 0.0
  %v444 = vmax.f32 %v363, 0.0
  %v445 = vmax.f32 %v366, 0.0
  %v446 = vmax.f32 %v369, 0.0
  %v447 = vmax.f32 %v372, 0.0
  %v448 = vmax.f32 %v375, 0.0
  %v449 = vmax.f32 %v378, 0.0
  %v450 = vmax.f32 %v381, 0.0
  %v451 = vmax.f32 %v384, 0.0
  %v452 = vmax.f32 %v387, 0.0
  %v453 = vmax.f32 %v390, 0.0
  %v454 = vmax.f32 %v393, 0.0
  %v455 = vmax.f32 %v396, 0.0
  %v456 = vmax.f32 %v399, 0.0
  %v457 = vmax.f32 %v402, 0.0
  %v458 = vmax.f32 %v405, 0.0
  %v459 = vmax.f32 %v408, 0.0
  %v460 = vmax.f32 %v411, 0.0
  %v461 = vmax.f32 %v414, 0.0
  %v462 = vmax.f32 %v417, 0.0
  %v463 = vmax.f32 %v420, 0.0
  %v464 = vmax.f32 %v423, 0.0
  %v465 = vmax.f32 %v426, 0.0
  %v466 = vmax.f32 %v429, 0.0
  %v467 = vmax.f32 %v432, 0.0
  %v468 = vmax.f32 %v435, 0.0
  %v469 = vld [vmem:[%s4] sm:$0xff]
  %v470 = vld [vmem:[%s4 + $0x8] sm:$0xff]
  %v471 = vld [vmem:[%s4 + $0x10] sm:$0xff]
  %v472 = vld [vmem:[%s4 + $0x18] sm:$0xff]
  %v473 = vld [vmem:[%s5] sm:$0x1]
  %v475 = vperm.slane %v473, 0
  %v478 = vsel %vm74, %v437, 0
  %v481 = vsel %vm74, %v438, 0
  %v484 = vsel %vm74, %v439, 0
  %v487 = vsel %vm74, %v440, 0
  %v490 = vsel %vm74, %v441, 0
  %v493 = vsel %vm74, %v442, 0
  %v496 = vsel %vm74, %v443, 0
  %v499 = vsel %vm74, %v444, 0
  %v502 = vsel %vm74, %v445, 0
  %v505 = vsel %vm74, %v446, 0
  %v508 = vsel %vm74, %v447, 0
  %v511 = vsel %vm74, %v448, 0
  %v514 = vsel %vm74, %v449, 0
  %v517 = vsel %vm74, %v450, 0
  %v520 = vsel %vm74, %v451, 0
  %v523 = vsel %vm74, %v452, 0
  %v526 = vsel %vm74, %v453, 0
  %v529 = vsel %vm74, %v454, 0
  %v532 = vsel %vm74, %v455, 0
  %v535 = vsel %vm74, %v456, 0
  %v538 = vsel %vm74, %v457, 0
  %v541 = vsel %vm74, %v458, 0
  %v544 = vsel %vm74, %v459, 0
  %v547 = vsel %vm74, %v460, 0
  %v550 = vsel %vm74, %v461, 0
  %v553 = vsel %vm74, %v462, 0
  %v556 = vsel %vm74, %v463, 0
  %v559 = vsel %vm74, %v464, 0
  %v562 = vsel %vm74, %v465, 0
  %v565 = vsel %vm74, %v466, 0
  %v568 = vsel %vm74, %v467, 0
  %v571 = vsel %vm74, %v468, 0
  %573 = vmatpush.msra.mxu0 0.0
  %574 = vmatpush.msra.mxu0 0.0
  %575 = vmatpush.msra.mxu0 0.0
  %576 = vmatpush.msra.mxu0 0.0
  %577 = vmatpush.msra.mxu0 0.0
  %578 = vmatpush.msra.mxu0 0.0
  %579 = vmatpush.msra.mxu0 0.0
  %580 = vmatpush.msra.mxu0 0.0
  %581 = vmatpush.msra.mxu0 0.0
  %582 = vmatpush.msra.mxu0 0.0
  %583 = vmatpush.msra.mxu0 0.0
  %584 = vmatpush.msra.mxu0 0.0
  %585 = vmatpush.msra.mxu0 %v472
  %586 = vmatpush.msra.mxu0 %v471
  %587 = vmatpush.msra.mxu0 %v470
  %588 = vmatpush.msra.mxu0 %v469
  %589 = vmatmul.f32.gmra.mxu0 %v478
  %v590 = vpop.f32.mrf.mxu0
  %v591 = vadd.f32 %v475, %v590
  %592 = vmatmul.f32.gmra.mxu0 %v481
  %v593 = vpop.f32.mrf.mxu0
  %v594 = vadd.f32 %v475, %v593
  %595 = vmatmul.f32.gmra.mxu0 %v484
  %v596 = vpop.f32.mrf.mxu0
  %v597 = vadd.f32 %v475, %v596
  %598 = vmatmul.f32.gmra.mxu0 %v487
  %v599 = vpop.f32.mrf.mxu0
  %v600 = vadd.f32 %v475, %v599
  %601 = vmatmul.f32.gmra.mxu0 %v490
  %v602 = vpop.f32.mrf.mxu0
  %v603 = vadd.f32 %v475, %v602
  %604 = vmatmul.f32.gmra.mxu0 %v493
  %v605 = vpop.f32.mrf.mxu0
  %v606 = vadd.f32 %v475, %v605
  %607 = vmatmul.f32.gmra.mxu0 %v496
  %v608 = vpop.f32.mrf.mxu0
  %v609 = vadd.f32 %v475, %v608
  %610 = vmatmul.f32.gmra.mxu0 %v499
  %v611 = vpop.f32.mrf.mxu0
  %v612 = vadd.f32 %v475, %v611
  %613 = vmatmul.f32.gmra.mxu0 %v502
  %v614 = vpop.f32.mrf.mxu0
  %v615 = vadd.f32 %v475, %v614
  %616 = vmatmul.f32.gmra.mxu0 %v505
  %v617 = vpop.f32.mrf.mxu0
  %v618 = vadd.f32 %v475, %v617
  %619 = vmatmul.f32.gmra.mxu0 %v508
  %v620 = vpop.f32.mrf.mxu0
  %v621 = vadd.f32 %v475, %v620
  %622 = vmatmul.f32.gmra.mxu0 %v511
  %v623 = vpop.f32.mrf.mxu0
  %v624 = vadd.f32 %v475, %v623
  %625 = vmatmul.f32.gmra.mxu0 %v514
  %v626 = vpop.f32.mrf.mxu0
  %v627 = vadd.f32 %v475, %v626
  %628 = vmatmul.f32.gmra.mxu0 %v517
  %v629 = vpop.f32.mrf.mxu0
  %v630 = vadd.f32 %v475, %v629
  %631 = vmatmul.f32.gmra.mxu0 %v520
  %v632 = vpop.f32.mrf.mxu0
  %v633 = vadd.f32 %v475, %v632
  %634 = vmatmul.f32.gmra.mxu0 %v523
  %v635 = vpop.f32.mrf.mxu0
  %v636 = vadd.f32 %v475, %v635
  %637 = vmatmul.f32.gmra.mxu0 %v526
  %v638 = vpop.f32.mrf.mxu0
  %v639 = vadd.f32 %v475, %v638
  %640 = vmatmul.f32.gmra.mxu0 %v529
  %v641 = vpop.f32.mrf.mxu0
  %v642 = vadd.f32 %v475, %v641
  %643 = vmatmul.f32.gmra.mxu0 %v532
  %v644 = vpop.f32.mrf.mxu0
  %v645 = vadd.f32 %v475, %v644
  %646 = vmatmul.f32.gmra.mxu0 %v535
  %v647 = vpop.f32.mrf.mxu0
  %v648 = vadd.f32 %v475, %v647
  %649 = vmatmul.f32.gmra.mxu0 %v538
  %v650 = vpop.f32.mrf.mxu0
  %v651 = vadd.f32 %v475, %v650
  %652 = vmatmul.f32.gmra.mxu0 %v541
  %v653 = vpop.f32.mrf.mxu0
  %v654 = vadd.f32 %v475, %v653
  %655 = vmatmul.f32.gmra.mxu0 %v544
  %v656 = vpop.f32.mrf.mxu0
  %v657 = vadd.f32 %v475, %v656
  %658 = vmatmul.f32.gmra.mxu0 %v547
  %v659 = vpop.f32.mrf.mxu0
  %v660 = vadd.f32 %v475, %v659
  %661 = vmatmul.f32.gmra.mxu0 %v550
  %v662 = vpop.f32.mrf.mxu0
  %v663 = vadd.f32 %v475, %v662
  %664 = vmatmul.f32.gmra.mxu0 %v553
  %v665 = vpop.f32.mrf.mxu0
  %v666 = vadd.f32 %v475, %v665
  %667 = vmatmul.f32.gmra.mxu0 %v556
  %v668 = vpop.f32.mrf.mxu0
  %v669 = vadd.f32 %v475, %v668
  %670 = vmatmul.f32.gmra.mxu0 %v559
  %v671 = vpop.f32.mrf.mxu0
  %v672 = vadd.f32 %v475, %v671
  %673 = vmatmul.f32.gmra.mxu0 %v562
  %v674 = vpop.f32.mrf.mxu0
  %v675 = vadd.f32 %v475, %v674
  %676 = vmatmul.f32.gmra.mxu0 %v565
  %v677 = vpop.f32.mrf.mxu0
  %v678 = vadd.f32 %v475, %v677
  %679 = vmatmul.f32.gmra.mxu0 %v568
  %v680 = vpop.f32.mrf.mxu0
  %v681 = vadd.f32 %v475, %v680
  %682 = vmatmul.f32.gmra.mxu0 %v571
  %v683 = vpop.f32.mrf.mxu0
  %v684 = vadd.f32 %v475, %v683
  %685 = vdwg.mxu0
  %v686 = vmax.f32 %v591, 0.0
  %v687 = vmax.f32 %v594, 0.0
  %v688 = vmax.f32 %v597, 0.0
  %v689 = vmax.f32 %v600, 0.0
  %v690 = vmax.f32 %v603, 0.0
  %v691 = vmax.f32 %v606, 0.0
  %v692 = vmax.f32 %v609, 0.0
  %v693 = vmax.f32 %v612, 0.0
  %v694 = vmax.f32 %v615, 0.0
  %v695 = vmax.f32 %v618, 0.0
  %v696 = vmax.f32 %v621, 0.0
  %v697 = vmax.f32 %v624, 0.0
  %v698 = vmax.f32 %v627, 0.0
  %v699 = vmax.f32 %v630, 0.0
  %v700 = vmax.f32 %v633, 0.0
  %v701 = vmax.f32 %v636, 0.0
  %v702 = vmax.f32 %v639, 0.0
  %v703 = vmax.f32 %v642, 0.0
  %v704 = vmax.f32 %v645, 0.0
  %v705 = vmax.f32 %v648, 0.0
  %v706 = vmax.f32 %v651, 0.0
  %v707 = vmax.f32 %v654, 0.0
  %v708 = vmax.f32 %v657, 0.0
  %v709 = vmax.f32 %v660, 0.0
  %v710 = vmax.f32 %v663, 0.0
  %v711 = vmax.f32 %v666, 0.0
  %v712 = vmax.f32 %v669, 0.0
  %v713 = vmax.f32 %v672, 0.0
  %v714 = vmax.f32 %v675, 0.0
  %v715 = vmax.f32 %v678, 0.0
  %v716 = vmax.f32 %v681, 0.0
  %v717 = vmax.f32 %v684, 0.0
  %vm718 = vcmask 130048
  %719 = vst.msk [vmem:[%s11] sm:$0xff] %vm718, %v686
  %720 = vst.msk [vmem:[%s11 + $0x8] sm:$0xff] %vm718, %v687
  %721 = vst.msk [vmem:[%s11 + $0x10] sm:$0xff] %vm718, %v688
  %722 = vst.msk [vmem:[%s11 + $0x18] sm:$0xff] %vm718, %v689
  %723 = vst.msk [vmem:[%s11 + $0x20] sm:$0xff] %vm718, %v690
  %724 = vst.msk [vmem:[%s11 + $0x28] sm:$0xff] %vm718, %v691
  %725 = vst.msk [vmem:[%s11 + $0x30] sm:$0xff] %vm718, %v692
  %726 = vst.msk [vmem:[%s11 + $0x38] sm:$0xff] %vm718, %v693
  %727 = vst.msk [vmem:[%s11 + $0x40] sm:$0xff] %vm718, %v694
  %728 = vst.msk [vmem:[%s11 + $0x48] sm:$0xff] %vm718, %v695
  %729 = vst.msk [vmem:[%s11 + $0x50] sm:$0xff] %vm718, %v696
  %730 = vst.msk [vmem:[%s11 + $0x58] sm:$0xff] %vm718, %v697
  %731 = vst.msk [vmem:[%s11 + $0x60] sm:$0xff] %vm718, %v698
  %732 = vst.msk [vmem:[%s11 + $0x68] sm:$0xff] %vm718, %v699
  %733 = vst.msk [vmem:[%s11 + $0x70] sm:$0xff] %vm718, %v700
  %734 = vst.msk [vmem:[%s11 + $0x78] sm:$0xff] %vm718, %v701
  %735 = vst.msk [vmem:[%s11 + $0x80] sm:$0xff] %vm718, %v702
  %736 = vst.msk [vmem:[%s11 + $0x88] sm:$0xff] %vm718, %v703
  %737 = vst.msk [vmem:[%s11 + $0x90] sm:$0xff] %vm718, %v704
  %738 = vst.msk [vmem:[%s11 + $0x98] sm:$0xff] %vm718, %v705
  %739 = vst.msk [vmem:[%s11 + $0xa0] sm:$0xff] %vm718, %v706
  %740 = vst.msk [vmem:[%s11 + $0xa8] sm:$0xff] %vm718, %v707
  %741 = vst.msk [vmem:[%s11 + $0xb0] sm:$0xff] %vm718, %v708
  %742 = vst.msk [vmem:[%s11 + $0xb8] sm:$0xff] %vm718, %v709
  %743 = vst.msk [vmem:[%s11 + $0xc0] sm:$0xff] %vm718, %v710
  %744 = vst.msk [vmem:[%s11 + $0xc8] sm:$0xff] %vm718, %v711
  %745 = vst.msk [vmem:[%s11 + $0xd0] sm:$0xff] %vm718, %v712
  %746 = vst.msk [vmem:[%s11 + $0xd8] sm:$0xff] %vm718, %v713
  %747 = vst.msk [vmem:[%s11 + $0xe0] sm:$0xff] %vm718, %v714
  %748 = vst.msk [vmem:[%s11 + $0xe8] sm:$0xff] %vm718, %v715
  %749 = vst.msk [vmem:[%s11 + $0xf0] sm:$0xff] %vm718, %v716
  %750 = vst.msk [vmem:[%s11 + $0xf8] sm:$0xff] %vm718, %v717
  %v751 = vld [vmem:[%s6] sm:$0xff]
  %v752 = vld [vmem:[%s6 + $0x8] sm:$0xff]
  %v753 = vld [vmem:[%s7] sm:$0x1]
  %v755 = vperm.slane %v753, 0
  %v758 = vsel %vm718, %v686, 0
  %v761 = vsel %vm718, %v687, 0
  %v764 = vsel %vm718, %v688, 0
  %v767 = vsel %vm718, %v689, 0
  %v770 = vsel %vm718, %v690, 0
  %v773 = vsel %vm718, %v691, 0
  %v776 = vsel %vm718, %v692, 0
  %v779 = vsel %vm718, %v693, 0
  %v782 = vsel %vm718, %v694, 0
  %v785 = vsel %vm718, %v695, 0
  %v788 = vsel %vm718, %v696, 0
  %v791 = vsel %vm718, %v697, 0
  %v794 = vsel %vm718, %v698, 0
  %v797 = vsel %vm718, %v699, 0
  %v800 = vsel %vm718, %v700, 0
  %v803 = vsel %vm718, %v701, 0
  %v806 = vsel %vm718, %v702, 0
  %v809 = vsel %vm718, %v703, 0
  %v812 = vsel %vm718, %v704, 0
  %v815 = vsel %vm718, %v705, 0
  %v818 = vsel %vm718, %v706, 0
  %v821 = vsel %vm718, %v707, 0
  %v824 = vsel %vm718, %v708, 0
  %v827 = vsel %vm718, %v709, 0
  %v830 = vsel %vm718, %v710, 0
  %v833 = vsel %vm718, %v711, 0
  %v836 = vsel %vm718, %v712, 0
  %v839 = vsel %vm718, %v713, 0
  %v842 = vsel %vm718, %v714, 0
  %v845 = vsel %vm718, %v715, 0
  %v848 = vsel %vm718, %v716, 0
  %v851 = vsel %vm718, %v717, 0
  %853 = vmatpush.msra.mxu0 0.0
  %854 = vmatpush.msra.mxu0 0.0
  %855 = vmatpush.msra.mxu0 0.0
  %856 = vmatpush.msra.mxu0 0.0
  %857 = vmatpush.msra.mxu0 0.0
  %858 = vmatpush.msra.mxu0 0.0
  %859 = vmatpush.msra.mxu0 0.0
  %860 = vmatpush.msra.mxu0 0.0
  %861 = vmatpush.msra.mxu0 0.0
  %862 = vmatpush.msra.mxu0 0.0
  %863 = vmatpush.msra.mxu0 0.0
  %864 = vmatpush.msra.mxu0 0.0
  %865 = vmatpush.msra.mxu0 0.0
  %866 = vmatpush.msra.mxu0 0.0
  %867 = vmatpush.msra.mxu0 %v752
  %868 = vmatpush.msra.mxu0 %v751
  %869 = vmatmul.f32.gmra.mxu0 %v758
  %v870 = vpop.f32.mrf.mxu0
  %v871 = vadd.f32 %v755, %v870
  %872 = vmatmul.f32.gmra.mxu0 %v761
  %v873 = vpop.f32.mrf.mxu0
  %v874 = vadd.f32 %v755, %v873
  %875 = vmatmul.f32.gmra.mxu0 %v764
  %v876 = vpop.f32.mrf.mxu0
  %v877 = vadd.f32 %v755, %v876
  %878 = vmatmul.f32.gmra.mxu0 %v767
  %v879 = vpop.f32.mrf.mxu0
  %v880 = vadd.f32 %v755, %v879
  %881 = vmatmul.f32.gmra.mxu0 %v770
  %v882 = vpop.f32.mrf.mxu0
  %v883 = vadd.f32 %v755, %v882
  %884 = vmatmul.f32.gmra.mxu0 %v773
  %v885 = vpop.f32.mrf.mxu0
  %v886 = vadd.f32 %v755, %v885
  %887 = vmatmul.f32.gmra.mxu0 %v776
  %v888 = vpop.f32.mrf.mxu0
  %v889 = vadd.f32 %v755, %v888
  %890 = vmatmul.f32.gmra.mxu0 %v779
  %v891 = vpop.f32.mrf.mxu0
  %v892 = vadd.f32 %v755, %v891
  %893 = vmatmul.f32.gmra.mxu0 %v782
  %v894 = vpop.f32.mrf.mxu0
  %v895 = vadd.f32 %v755, %v894
  %896 = vmatmul.f32.gmra.mxu0 %v785
  %v897 = vpop.f32.mrf.mxu0
  %v898 = vadd.f32 %v755, %v897
  %899 = vmatmul.f32.gmra.mxu0 %v788
  %v900 = vpop.f32.mrf.mxu0
  %v901 = vadd.f32 %v755, %v900
  %902 = vmatmul.f32.gmra.mxu0 %v791
  %v903 = vpop.f32.mrf.mxu0
  %v904 = vadd.f32 %v755, %v903
  %905 = vmatmul.f32.gmra.mxu0 %v794
  %v906 = vpop.f32.mrf.mxu0
  %v907 = vadd.f32 %v755, %v906
  %908 = vmatmul.f32.gmra.mxu0 %v797
  %v909 = vpop.f32.mrf.mxu0
  %v910 = vadd.f32 %v755, %v909
  %911 = vmatmul.f32.gmra.mxu0 %v800
  %v912 = vpop.f32.mrf.mxu0
  %v913 = vadd.f32 %v755, %v912
  %914 = vmatmul.f32.gmra.mxu0 %v803
  %v915 = vpop.f32.mrf.mxu0
  %v916 = vadd.f32 %v755, %v915
  %917 = vmatmul.f32.gmra.mxu0 %v806
  %v918 = vpop.f32.mrf.mxu0
  %v919 = vadd.f32 %v755, %v918
  %920 = vmatmul.f32.gmra.mxu0 %v809
  %v921 = vpop.f32.mrf.mxu0
  %v922 = vadd.f32 %v755, %v921
  %923 = vmatmul.f32.gmra.mxu0 %v812
  %v924 = vpop.f32.mrf.mxu0
  %v925 = vadd.f32 %v755, %v924
  %926 = vmatmul.f32.gmra.mxu0 %v815
  %v927 = vpop.f32.mrf.mxu0
  %v928 = vadd.f32 %v755, %v927
  %929 = vmatmul.f32.gmra.mxu0 %v818
  %v930 = vpop.f32.mrf.mxu0
  %v931 = vadd.f32 %v755, %v930
  %932 = vmatmul.f32.gmra.mxu0 %v821
  %v933 = vpop.f32.mrf.mxu0
  %v934 = vadd.f32 %v755, %v933
  %935 = vmatmul.f32.gmra.mxu0 %v824
  %v936 = vpop.f32.mrf.mxu0
  %v937 = vadd.f32 %v755, %v936
  %938 = vmatmul.f32.gmra.mxu0 %v827
  %v939 = vpop.f32.mrf.mxu0
  %v940 = vadd.f32 %v755, %v939
  %941 = vmatmul.f32.gmra.mxu0 %v830
  %v942 = vpop.f32.mrf.mxu0
  %v943 = vadd.f32 %v755, %v942
  %944 = vmatmul.f32.gmra.mxu0 %v833
  %v945 = vpop.f32.mrf.mxu0
  %v946 = vadd.f32 %v755, %v945
  %947 = vmatmul.f32.gmra.mxu0 %v836
  %v948 = vpop.f32.mrf.mxu0
  %v949 = vadd.f32 %v755, %v948
  %950 = vmatmul.f32.gmra.mxu0 %v839
  %v951 = vpop.f32.mrf.mxu0
  %v952 = vadd.f32 %v755, %v951
  %953 = vmatmul.f32.gmra.mxu0 %v842
  %v954 = vpop.f32.mrf.mxu0
  %v955 = vadd.f32 %v755, %v954
  %956 = vmatmul.f32.gmra.mxu0 %v845
  %v957 = vpop.f32.mrf.mxu0
  %v958 = vadd.f32 %v755, %v957
  %959 = vmatmul.f32.gmra.mxu0 %v848
  %v960 = vpop.f32.mrf.mxu0
  %v961 = vadd.f32 %v755, %v960
  %962 = vmatmul.f32.gmra.mxu0 %v851
  %v963 = vpop.f32.mrf.mxu0
  %v964 = vadd.f32 %v755, %v963
  %965 = vdwg.mxu0
  %v966 = vmax.f32 %v871, 0.0
  %v967 = vmax.f32 %v874, 0.0
  %v968 = vmax.f32 %v877, 0.0
  %v969 = vmax.f32 %v880, 0.0
  %v970 = vmax.f32 %v883, 0.0
  %v971 = vmax.f32 %v886, 0.0
  %v972 = vmax.f32 %v889, 0.0
  %v973 = vmax.f32 %v892, 0.0
  %v974 = vmax.f32 %v895, 0.0
  %v975 = vmax.f32 %v898, 0.0
  %v976 = vmax.f32 %v901, 0.0
  %v977 = vmax.f32 %v904, 0.0
  %v978 = vmax.f32 %v907, 0.0
  %v979 = vmax.f32 %v910, 0.0
  %v980 = vmax.f32 %v913, 0.0
  %v981 = vmax.f32 %v916, 0.0
  %v982 = vmax.f32 %v919, 0.0
  %v983 = vmax.f32 %v922, 0.0
  %v984 = vmax.f32 %v925, 0.0
  %v985 = vmax.f32 %v928, 0.0
  %v986 = vmax.f32 %v931, 0.0
  %v987 = vmax.f32 %v934, 0.0
  %v988 = vmax.f32 %v937, 0.0
  %v989 = vmax.f32 %v940, 0.0
  %v990 = vmax.f32 %v943, 0.0
  %v991 = vmax.f32 %v946, 0.0
  %v992 = vmax.f32 %v949, 0.0
  %v993 = vmax.f32 %v952, 0.0
  %v994 = vmax.f32 %v955, 0.0
  %v995 = vmax.f32 %v958, 0.0
  %v996 = vmax.f32 %v961, 0.0
  %v997 = vmax.f32 %v964, 0.0
  %v998 = vld [vmem:[%s8] sm:$0xff]
  %v999 = vld [vmem:[%s8 + $0x8] sm:$0xff]
  %v1000 = vld [vmem:[%s8 + $0x10] sm:$0xff]
  %v1001 = vld [vmem:[%s8 + $0x18] sm:$0xff]
  %v1002 = vld [vmem:[%s9] sm:$0x1]
  %v1004 = vperm.slane %v1002, 0
  %v1007 = vsel %vm74, %v966, 0
  %v1010 = vsel %vm74, %v967, 0
  %v1013 = vsel %vm74, %v968, 0
  %v1016 = vsel %vm74, %v969, 0
  %v1019 = vsel %vm74, %v970, 0
  %v1022 = vsel %vm74, %v971, 0
  %v1025 = vsel %vm74, %v972, 0
  %v1028 = vsel %vm74, %v973, 0
  %v1031 = vsel %vm74, %v974, 0
  %v1034 = vsel %vm74, %v975, 0
  %v1037 = vsel %vm74, %v976, 0
  %v1040 = vsel %vm74, %v977, 0
  %v1043 = vsel %vm74, %v978, 0
  %v1046 = vsel %vm74, %v979, 0
  %v1049 = vsel %vm74, %v980, 0
  %v1052 = vsel %vm74, %v981, 0
  %v1055 = vsel %vm74, %v982, 0
  %v1058 = vsel %vm74, %v983, 0
  %v1061 = vsel %vm74, %v984, 0
  %v1064 = vsel %vm74, %v985, 0
  %v1067 = vsel %vm74, %v986, 0
  %v1070 = vsel %vm74, %v987, 0
  %v1073 = vsel %vm74, %v988, 0
  %v1076 = vsel %vm74, %v989, 0
  %v1079 = vsel %vm74, %v990, 0
  %v1082 = vsel %vm74, %v991, 0
  %v1085 = vsel %vm74, %v992, 0
  %v1088 = vsel %vm74, %v993, 0
  %v1091 = vsel %vm74, %v994, 0
  %v1094 = vsel %vm74, %v995, 0
  %v1097 = vsel %vm74, %v996, 0
  %v1100 = vsel %vm74, %v997, 0
  %1102 = vmatpush.msra.mxu0 0.0
  %1103 = vmatpush.msra.mxu0 0.0
  %1104 = vmatpush.msra.mxu0 0.0
  %1105 = vmatpush.msra.mxu0 0.0
  %1106 = vmatpush.msra.mxu0 0.0
  %1107 = vmatpush.msra.mxu0 0.0
  %1108 = vmatpush.msra.mxu0 0.0
  %1109 = vmatpush.msra.mxu0 0.0
  %1110 = vmatpush.msra.mxu0 0.0
  %1111 = vmatpush.msra.mxu0 0.0
  %1112 = vmatpush.msra.mxu0 0.0
  %1113 = vmatpush.msra.mxu0 0.0
  %1114 = vmatpush.msra.mxu0 %v1001
  %1115 = vmatpush.msra.mxu0 %v1000
  %1116 = vmatpush.msra.mxu0 %v999
  %1117 = vmatpush.msra.mxu0 %v998
  %1118 = vmatmul.f32.gmra.mxu0 %v1007
  %v1119 = vpop.f32.mrf.mxu0
  %v1120 = vadd.f32 %v1004, %v1119
  %1121 = vmatmul.f32.gmra.mxu0 %v1010
  %v1122 = vpop.f32.mrf.mxu0
  %v1123 = vadd.f32 %v1004, %v1122
  %1124 = vmatmul.f32.gmra.mxu0 %v1013
  %v1125 = vpop.f32.mrf.mxu0
  %v1126 = vadd.f32 %v1004, %v1125
  %1127 = vmatmul.f32.gmra.mxu0 %v1016
  %v1128 = vpop.f32.mrf.mxu0
  %v1129 = vadd.f32 %v1004, %v1128
  %1130 = vmatmul.f32.gmra.mxu0 %v1019
  %v1131 = vpop.f32.mrf.mxu0
  %v1132 = vadd.f32 %v1004, %v1131
  %1133 = vmatmul.f32.gmra.mxu0 %v1022
  %v1134 = vpop.f32.mrf.mxu0
  %v1135 = vadd.f32 %v1004, %v1134
  %1136 = vmatmul.f32.gmra.mxu0 %v1025
  %v1137 = vpop.f32.mrf.mxu0
  %v1138 = vadd.f32 %v1004, %v1137
  %1139 = vmatmul.f32.gmra.mxu0 %v1028
  %v1140 = vpop.f32.mrf.mxu0
  %v1141 = vadd.f32 %v1004, %v1140
  %1142 = vmatmul.f32.gmra.mxu0 %v1031
  %v1143 = vpop.f32.mrf.mxu0
  %v1144 = vadd.f32 %v1004, %v1143
  %1145 = vmatmul.f32.gmra.mxu0 %v1034
  %v1146 = vpop.f32.mrf.mxu0
  %v1147 = vadd.f32 %v1004, %v1146
  %1148 = vmatmul.f32.gmra.mxu0 %v1037
  %v1149 = vpop.f32.mrf.mxu0
  %v1150 = vadd.f32 %v1004, %v1149
  %1151 = vmatmul.f32.gmra.mxu0 %v1040
  %v1152 = vpop.f32.mrf.mxu0
  %v1153 = vadd.f32 %v1004, %v1152
  %1154 = vmatmul.f32.gmra.mxu0 %v1043
  %v1155 = vpop.f32.mrf.mxu0
  %v1156 = vadd.f32 %v1004, %v1155
  %1157 = vmatmul.f32.gmra.mxu0 %v1046
  %v1158 = vpop.f32.mrf.mxu0
  %v1159 = vadd.f32 %v1004, %v1158
  %1160 = vmatmul.f32.gmra.mxu0 %v1049
  %v1161 = vpop.f32.mrf.mxu0
  %v1162 = vadd.f32 %v1004, %v1161
  %1163 = vmatmul.f32.gmra.mxu0 %v1052
  %v1164 = vpop.f32.mrf.mxu0
  %v1165 = vadd.f32 %v1004, %v1164
  %1166 = vmatmul.f32.gmra.mxu0 %v1055
  %v1167 = vpop.f32.mrf.mxu0
  %v1168 = vadd.f32 %v1004, %v1167
  %1169 = vmatmul.f32.gmra.mxu0 %v1058
  %v1170 = vpop.f32.mrf.mxu0
  %v1171 = vadd.f32 %v1004, %v1170
  %1172 = vmatmul.f32.gmra.mxu0 %v1061
  %v1173 = vpop.f32.mrf.mxu0
  %v1174 = vadd.f32 %v1004, %v1173
  %1175 = vmatmul.f32.gmra.mxu0 %v1064
  %v1176 = vpop.f32.mrf.mxu0
  %v1177 = vadd.f32 %v1004, %v1176
  %1178 = vmatmul.f32.gmra.mxu0 %v1067
  %v1179 = vpop.f32.mrf.mxu0
  %v1180 = vadd.f32 %v1004, %v1179
  %1181 = vmatmul.f32.gmra.mxu0 %v1070
  %v1182 = vpop.f32.mrf.mxu0
  %v1183 = vadd.f32 %v1004, %v1182
  %1184 = vmatmul.f32.gmra.mxu0 %v1073
  %v1185 = vpop.f32.mrf.mxu0
  %v1186 = vadd.f32 %v1004, %v1185
  %1187 = vmatmul.f32.gmra.mxu0 %v1076
  %v1188 = vpop.f32.mrf.mxu0
  %v1189 = vadd.f32 %v1004, %v1188
  %1190 = vmatmul.f32.gmra.mxu0 %v1079
  %v1191 = vpop.f32.mrf.mxu0
  %v1192 = vadd.f32 %v1004, %v1191
  %1193 = vmatmul.f32.gmra.mxu0 %v1082
  %v1194 = vpop.f32.mrf.mxu0
  %v1195 = vadd.f32 %v1004, %v1194
  %1196 = vmatmul.f32.gmra.mxu0 %v1085
  %v1197 = vpop.f32.mrf.mxu0
  %v1198 = vadd.f32 %v1004, %v1197
  %1199 = vmatmul.f32.gmra.mxu0 %v1088
  %v1200 = vpop.f32.mrf.mxu0
  %v1201 = vadd.f32 %v1004, %v1200
  %1202 = vmatmul.f32.gmra.mxu0 %v1091
  %v1203 = vpop.f32.mrf.mxu0
  %v1204 = vadd.f32 %v1004, %v1203
  %1205 = vmatmul.f32.gmra.mxu0 %v1094
  %v1206 = vpop.f32.mrf.mxu0
  %v1207 = vadd.f32 %v1004, %v1206
  %1208 = vmatmul.f32.gmra.mxu0 %v1097
  %v1209 = vpop.f32.mrf.mxu0
  %v1210 = vadd.f32 %v1004, %v1209
  %1211 = vmatmul.f32.gmra.mxu0 %v1100
  %v1212 = vpop.f32.mrf.mxu0
  %v1213 = vadd.f32 %v1004, %v1212
  %1214 = vdwg.mxu0
  %v1215 = vsub.f32 0.0, %v1120
  %v1216 = vsub.f32 0.0, %v1123
  %v1217 = vsub.f32 0.0, %v1126
  %v1218 = vsub.f32 0.0, %v1129
  %v1219 = vsub.f32 0.0, %v1132
  %v1220 = vsub.f32 0.0, %v1135
  %v1221 = vsub.f32 0.0, %v1138
  %v1222 = vsub.f32 0.0, %v1141
  %v1223 = vsub.f32 0.0, %v1144
  %v1224 = vsub.f32 0.0, %v1147
  %v1225 = vsub.f32 0.0, %v1150
  %v1226 = vsub.f32 0.0, %v1153
  %v1227 = vsub.f32 0.0, %v1156
  %v1228 = vsub.f32 0.0, %v1159
  %v1229 = vsub.f32 0.0, %v1162
  %v1230 = vsub.f32 0.0, %v1165
  %v1231 = vsub.f32 0.0, %v1168
  %v1232 = vsub.f32 0.0, %v1171
  %v1233 = vsub.f32 0.0, %v1174
  %v1234 = vsub.f32 0.0, %v1177
  %v1235 = vsub.f32 0.0, %v1180
  %v1236 = vsub.f32 0.0, %v1183
  %v1237 = vsub.f32 0.0, %v1186
  %v1238 = vsub.f32 0.0, %v1189
  %v1239 = vsub.f32 0.0, %v1192
  %v1240 = vsub.f32 0.0, %v1195
  %v1241 = vsub.f32 0.0, %v1198
  %v1242 = vsub.f32 0.0, %v1201
  %v1243 = vsub.f32 0.0, %v1204
  %v1244 = vsub.f32 0.0, %v1207
  %v1245 = vsub.f32 0.0, %v1210
  %v1246 = vsub.f32 0.0, %v1213
  %v1247 = vmul.f32 %v1215, 1.442695
  %v1248 = vpow.pop %v1247
  %v1249 = vmul.f32 %v1216, 1.442695
  %v1250 = vpow.pop %v1249
  %v1251 = vmul.f32 %v1217, 1.442695
  %v1252 = vpow.pop %v1251
  %v1253 = vmul.f32 %v1218, 1.442695
  %v1254 = vpow.pop %v1253
  %v1255 = vmul.f32 %v1219, 1.442695
  %v1256 = vpow.pop %v1255
  %v1257 = vmul.f32 %v1220, 1.442695
  %v1258 = vpow.pop %v1257
  %v1259 = vmul.f32 %v1221, 1.442695
  %v1260 = vpow.pop %v1259
  %v1261 = vmul.f32 %v1222, 1.442695
  %v1262 = vpow.pop %v1261
  %v1263 = vmul.f32 %v1223, 1.442695
  %v1264 = vpow.pop %v1263
  %v1265 = vmul.f32 %v1224, 1.442695
  %v1266 = vpow.pop %v1265
  %v1267 = vmul.f32 %v1225, 1.442695
  %v1268 = vpow.pop %v1267
  %v1269 = vmul.f32 %v1226, 1.442695
  %v1270 = vpow.pop %v1269
  %v1271 = vmul.f32 %v1227, 1.442695
  %v1272 = vpow.pop %v1271
  %v1273 = vmul.f32 %v1228, 1.442695
  %v1274 = vpow.pop %v1273
  %v1275 = vmul.f32 %v1229, 1.442695
  %v1276 = vpow.pop %v1275
  %v1277 = vmul.f32 %v1230, 1.442695
  %v1278 = vpow.pop %v1277
  %v1279 = vmul.f32 %v1231, 1.442695
  %v1280 = vpow.pop %v1279
  %v1281 = vmul.f32 %v1232, 1.442695
  %v1282 = vpow.pop %v1281
  %v1283 = vmul.f32 %v1233, 1.442695
  %v1284 = vpow.pop %v1283
  %v1285 = vmul.f32 %v1234, 1.442695
  %v1286 = vpow.pop %v1285
  %v1287 = vmul.f32 %v1235, 1.442695
  %v1288 = vpow.pop %v1287
  %v1289 = vmul.f32 %v1236, 1.442695
  %v1290 = vpow.pop %v1289
  %v1291 = vmul.f32 %v1237, 1.442695
  %v1292 = vpow.pop %v1291
  %v1293 = vmul.f32 %v1238, 1.442695
  %v1294 = vpow.pop %v1293
  %v1295 = vmul.f32 %v1239, 1.442695
  %v1296 = vpow.pop %v1295
  %v1297 = vmul.f32 %v1240, 1.442695
  %v1298 = vpow.pop %v1297
  %v1299 = vmul.f32 %v1241, 1.442695
  %v1300 = vpow.pop %v1299
  %v1301 = vmul.f32 %v1242, 1.442695
  %v1302 = vpow.pop %v1301
  %v1303 = vmul.f32 %v1243, 1.442695
  %v1304 = vpow.pop %v1303
  %v1305 = vmul.f32 %v1244, 1.442695
  %v1306 = vpow.pop %v1305
  %v1307 = vmul.f32 %v1245, 1.442695
  %v1308 = vpow.pop %v1307
  %v1309 = vmul.f32 %v1246, 1.442695
  %v1310 = vpow.pop %v1309
  %v1311 = vadd.f32 %v1248, 1.0
  %v1312 = vadd.f32 %v1250, 1.0
  %v1313 = vadd.f32 %v1252, 1.0
  %v1314 = vadd.f32 %v1254, 1.0
  %v1315 = vadd.f32 %v1256, 1.0
  %v1316 = vadd.f32 %v1258, 1.0
  %v1317 = vadd.f32 %v1260, 1.0
  %v1318 = vadd.f32 %v1262, 1.0
  %v1319 = vadd.f32 %v1264, 1.0
  %v1320 = vadd.f32 %v1266, 1.0
  %v1321 = vadd.f32 %v1268, 1.0
  %v1322 = vadd.f32 %v1270, 1.0
  %v1323 = vadd.f32 %v1272, 1.0
  %v1324 = vadd.f32 %v1274, 1.0
  %v1325 = vadd.f32 %v1276, 1.0
  %v1326 = vadd.f32 %v1278, 1.0
  %v1327 = vadd.f32 %v1280, 1.0
  %v1328 = vadd.f32 %v1282, 1.0
  %v1329 = vadd.f32 %v1284, 1.0
  %v1330 = vadd.f32 %v1286, 1.0
  %v1331 = vadd.f32 %v1288, 1.0
  %v1332 = vadd.f32 %v1290, 1.0
  %v1333 = vadd.f32 %v1292, 1.0
  %v1334 = vadd.f32 %v1294, 1.0
  %v1335 = vadd.f32 %v1296, 1.0
  %v1336 = vadd.f32 %v1298, 1.0
  %v1337 = vadd.f32 %v1300, 1.0
  %v1338 = vadd.f32 %v1302, 1.0
  %v1339 = vadd.f32 %v1304, 1.0
  %v1340 = vadd.f32 %v1306, 1.0
  %v1341 = vadd.f32 %v1308, 1.0
  %v1342 = vadd.f32 %v1310, 1.0
  %v1343 = vrcp.pop %v1311
  %v1344 = vmul.f32 %v1311, %v1343
  %v1345 = vsub.f32 1.0, %v1344
  %v1346 = vmul.f32 %v1343, %v1345
  %v1347 = vadd.f32 %v1343, %v1346
  %vm1348 = vweird.f32 %v1311
  %vm1349 = vweird.f32 %v1343
  %vm1350 = vmor %vm1348, %vm1349
  %v1351 = vsel %vm1350, %v1343, %v1347
  %v1352 = vand.u32 2147483647, %v1311
  %vm1353 = vcmp.eq.f32.partialorder %v1352, 8.507059e+37
  %v1354 = vand.u32 %v1311, 2147483648
  %v1355 = vor.u32 1.1754944e-38, %v1354
  %v1356 = vsel %vm1353, %v1355, %v1351
  %v1357 = vmul.f32 1.0, %v1356
  %v1358 = vrcp.pop %v1312
  %v1359 = vmul.f32 %v1312, %v1358
  %v1360 = vsub.f32 1.0, %v1359
  %v1361 = vmul.f32 %v1358, %v1360
  %v1362 = vadd.f32 %v1358, %v1361
  %vm1363 = vweird.f32 %v1312
  %vm1364 = vweird.f32 %v1358
  %vm1365 = vmor %vm1363, %vm1364
  %v1366 = vsel %vm1365, %v1358, %v1362
  %v1367 = vand.u32 2147483647, %v1312
  %vm1368 = vcmp.eq.f32.partialorder %v1367, 8.507059e+37
  %v1369 = vand.u32 %v1312, 2147483648
  %v1370 = vor.u32 1.1754944e-38, %v1369
  %v1371 = vsel %vm1368, %v1370, %v1366
  %v1372 = vmul.f32 1.0, %v1371
  %v1373 = vrcp.pop %v1313
  %v1374 = vmul.f32 %v1313, %v1373
  %v1375 = vsub.f32 1.0, %v1374
  %v1376 = vmul.f32 %v1373, %v1375
  %v1377 = vadd.f32 %v1373, %v1376
  %vm1378 = vweird.f32 %v1313
  %vm1379 = vweird.f32 %v1373
  %vm1380 = vmor %vm1378, %vm1379
  %v1381 = vsel %vm1380, %v1373, %v1377
  %v1382 = vand.u32 2147483647, %v1313
  %vm1383 = vcmp.eq.f32.partialorder %v1382, 8.507059e+37
  %v1384 = vand.u32 %v1313, 2147483648
  %v1385 = vor.u32 1.1754944e-38, %v1384
  %v1386 = vsel %vm1383, %v1385, %v1381
  %v1387 = vmul.f32 1.0, %v1386
  %v1388 = vrcp.pop %v1314
  %v1389 = vmul.f32 %v1314, %v1388
  %v1390 = vsub.f32 1.0, %v1389
  %v1391 = vmul.f32 %v1388, %v1390
  %v1392 = vadd.f32 %v1388, %v1391
  %vm1393 = vweird.f32 %v1314
  %vm1394 = vweird.f32 %v1388
  %vm1395 = vmor %vm1393, %vm1394
  %v1396 = vsel %vm1395, %v1388, %v1392
  %v1397 = vand.u32 2147483647, %v1314
  %vm1398 = vcmp.eq.f32.partialorder %v1397, 8.507059e+37
  %v1399 = vand.u32 %v1314, 2147483648
  %v1400 = vor.u32 1.1754944e-38, %v1399
  %v1401 = vsel %vm1398, %v1400, %v1396
  %v1402 = vmul.f32 1.0, %v1401
  %v1403 = vrcp.pop %v1315
  %v1404 = vmul.f32 %v1315, %v1403
  %v1405 = vsub.f32 1.0, %v1404
  %v1406 = vmul.f32 %v1403, %v1405
  %v1407 = vadd.f32 %v1403, %v1406
  %vm1408 = vweird.f32 %v1315
  %vm1409 = vweird.f32 %v1403
  %vm1410 = vmor %vm1408, %vm1409
  %v1411 = vsel %vm1410, %v1403, %v1407
  %v1412 = vand.u32 2147483647, %v1315
  %vm1413 = vcmp.eq.f32.partialorder %v1412, 8.507059e+37
  %v1414 = vand.u32 %v1315, 2147483648
  %v1415 = vor.u32 1.1754944e-38, %v1414
  %v1416 = vsel %vm1413, %v1415, %v1411
  %v1417 = vmul.f32 1.0, %v1416
  %v1418 = vrcp.pop %v1316
  %v1419 = vmul.f32 %v1316, %v1418
  %v1420 = vsub.f32 1.0, %v1419
  %v1421 = vmul.f32 %v1418, %v1420
  %v1422 = vadd.f32 %v1418, %v1421
  %vm1423 = vweird.f32 %v1316
  %vm1424 = vweird.f32 %v1418
  %vm1425 = vmor %vm1423, %vm1424
  %v1426 = vsel %vm1425, %v1418, %v1422
  %v1427 = vand.u32 2147483647, %v1316
  %vm1428 = vcmp.eq.f32.partialorder %v1427, 8.507059e+37
  %v1429 = vand.u32 %v1316, 2147483648
  %v1430 = vor.u32 1.1754944e-38, %v1429
  %v1431 = vsel %vm1428, %v1430, %v1426
  %v1432 = vmul.f32 1.0, %v1431
  %v1433 = vrcp.pop %v1317
  %v1434 = vmul.f32 %v1317, %v1433
  %v1435 = vsub.f32 1.0, %v1434
  %v1436 = vmul.f32 %v1433, %v1435
  %v1437 = vadd.f32 %v1433, %v1436
  %vm1438 = vweird.f32 %v1317
  %vm1439 = vweird.f32 %v1433
  %vm1440 = vmor %vm1438, %vm1439
  %v1441 = vsel %vm1440, %v1433, %v1437
  %v1442 = vand.u32 2147483647, %v1317
  %vm1443 = vcmp.eq.f32.partialorder %v1442, 8.507059e+37
  %v1444 = vand.u32 %v1317, 2147483648
  %v1445 = vor.u32 1.1754944e-38, %v1444
  %v1446 = vsel %vm1443, %v1445, %v1441
  %v1447 = vmul.f32 1.0, %v1446
  %v1448 = vrcp.pop %v1318
  %v1449 = vmul.f32 %v1318, %v1448
  %v1450 = vsub.f32 1.0, %v1449
  %v1451 = vmul.f32 %v1448, %v1450
  %v1452 = vadd.f32 %v1448, %v1451
  %vm1453 = vweird.f32 %v1318
  %vm1454 = vweird.f32 %v1448
  %vm1455 = vmor %vm1453, %vm1454
  %v1456 = vsel %vm1455, %v1448, %v1452
  %v1457 = vand.u32 2147483647, %v1318
  %vm1458 = vcmp.eq.f32.partialorder %v1457, 8.507059e+37
  %v1459 = vand.u32 %v1318, 2147483648
  %v1460 = vor.u32 1.1754944e-38, %v1459
  %v1461 = vsel %vm1458, %v1460, %v1456
  %v1462 = vmul.f32 1.0, %v1461
  %v1463 = vrcp.pop %v1319
  %v1464 = vmul.f32 %v1319, %v1463
  %v1465 = vsub.f32 1.0, %v1464
  %v1466 = vmul.f32 %v1463, %v1465
  %v1467 = vadd.f32 %v1463, %v1466
  %vm1468 = vweird.f32 %v1319
  %vm1469 = vweird.f32 %v1463
  %vm1470 = vmor %vm1468, %vm1469
  %v1471 = vsel %vm1470, %v1463, %v1467
  %v1472 = vand.u32 2147483647, %v1319
  %vm1473 = vcmp.eq.f32.partialorder %v1472, 8.507059e+37
  %v1474 = vand.u32 %v1319, 2147483648
  %v1475 = vor.u32 1.1754944e-38, %v1474
  %v1476 = vsel %vm1473, %v1475, %v1471
  %v1477 = vmul.f32 1.0, %v1476
  %v1478 = vrcp.pop %v1320
  %v1479 = vmul.f32 %v1320, %v1478
  %v1480 = vsub.f32 1.0, %v1479
  %v1481 = vmul.f32 %v1478, %v1480
  %v1482 = vadd.f32 %v1478, %v1481
  %vm1483 = vweird.f32 %v1320
  %vm1484 = vweird.f32 %v1478
  %vm1485 = vmor %vm1483, %vm1484
  %v1486 = vsel %vm1485, %v1478, %v1482
  %v1487 = vand.u32 2147483647, %v1320
  %vm1488 = vcmp.eq.f32.partialorder %v1487, 8.507059e+37
  %v1489 = vand.u32 %v1320, 2147483648
  %v1490 = vor.u32 1.1754944e-38, %v1489
  %v1491 = vsel %vm1488, %v1490, %v1486
  %v1492 = vmul.f32 1.0, %v1491
  %v1493 = vrcp.pop %v1321
  %v1494 = vmul.f32 %v1321, %v1493
  %v1495 = vsub.f32 1.0, %v1494
  %v1496 = vmul.f32 %v1493, %v1495
  %v1497 = vadd.f32 %v1493, %v1496
  %vm1498 = vweird.f32 %v1321
  %vm1499 = vweird.f32 %v1493
  %vm1500 = vmor %vm1498, %vm1499
  %v1501 = vsel %vm1500, %v1493, %v1497
  %v1502 = vand.u32 2147483647, %v1321
  %vm1503 = vcmp.eq.f32.partialorder %v1502, 8.507059e+37
  %v1504 = vand.u32 %v1321, 2147483648
  %v1505 = vor.u32 1.1754944e-38, %v1504
  %v1506 = vsel %vm1503, %v1505, %v1501
  %v1507 = vmul.f32 1.0, %v1506
  %v1508 = vrcp.pop %v1322
  %v1509 = vmul.f32 %v1322, %v1508
  %v1510 = vsub.f32 1.0, %v1509
  %v1511 = vmul.f32 %v1508, %v1510
  %v1512 = vadd.f32 %v1508, %v1511
  %vm1513 = vweird.f32 %v1322
  %vm1514 = vweird.f32 %v1508
  %vm1515 = vmor %vm1513, %vm1514
  %v1516 = vsel %vm1515, %v1508, %v1512
  %v1517 = vand.u32 2147483647, %v1322
  %vm1518 = vcmp.eq.f32.partialorder %v1517, 8.507059e+37
  %v1519 = vand.u32 %v1322, 2147483648
  %v1520 = vor.u32 1.1754944e-38, %v1519
  %v1521 = vsel %vm1518, %v1520, %v1516
  %v1522 = vmul.f32 1.0, %v1521
  %v1523 = vrcp.pop %v1323
  %v1524 = vmul.f32 %v1323, %v1523
  %v1525 = vsub.f32 1.0, %v1524
  %v1526 = vmul.f32 %v1523, %v1525
  %v1527 = vadd.f32 %v1523, %v1526
  %vm1528 = vweird.f32 %v1323
  %vm1529 = vweird.f32 %v1523
  %vm1530 = vmor %vm1528, %vm1529
  %v1531 = vsel %vm1530, %v1523, %v1527
  %v1532 = vand.u32 2147483647, %v1323
  %vm1533 = vcmp.eq.f32.partialorder %v1532, 8.507059e+37
  %v1534 = vand.u32 %v1323, 2147483648
  %v1535 = vor.u32 1.1754944e-38, %v1534
  %v1536 = vsel %vm1533, %v1535, %v1531
  %v1537 = vmul.f32 1.0, %v1536
  %v1538 = vrcp.pop %v1324
  %v1539 = vmul.f32 %v1324, %v1538
  %v1540 = vsub.f32 1.0, %v1539
  %v1541 = vmul.f32 %v1538, %v1540
  %v1542 = vadd.f32 %v1538, %v1541
  %vm1543 = vweird.f32 %v1324
  %vm1544 = vweird.f32 %v1538
  %vm1545 = vmor %vm1543, %vm1544
  %v1546 = vsel %vm1545, %v1538, %v1542
  %v1547 = vand.u32 2147483647, %v1324
  %vm1548 = vcmp.eq.f32.partialorder %v1547, 8.507059e+37
  %v1549 = vand.u32 %v1324, 2147483648
  %v1550 = vor.u32 1.1754944e-38, %v1549
  %v1551 = vsel %vm1548, %v1550, %v1546
  %v1552 = vmul.f32 1.0, %v1551
  %v1553 = vrcp.pop %v1325
  %v1554 = vmul.f32 %v1325, %v1553
  %v1555 = vsub.f32 1.0, %v1554
  %v1556 = vmul.f32 %v1553, %v1555
  %v1557 = vadd.f32 %v1553, %v1556
  %vm1558 = vweird.f32 %v1325
  %vm1559 = vweird.f32 %v1553
  %vm1560 = vmor %vm1558, %vm1559
  %v1561 = vsel %vm1560, %v1553, %v1557
  %v1562 = vand.u32 2147483647, %v1325
  %vm1563 = vcmp.eq.f32.partialorder %v1562, 8.507059e+37
  %v1564 = vand.u32 %v1325, 2147483648
  %v1565 = vor.u32 1.1754944e-38, %v1564
  %v1566 = vsel %vm1563, %v1565, %v1561
  %v1567 = vmul.f32 1.0, %v1566
  %v1568 = vrcp.pop %v1326
  %v1569 = vmul.f32 %v1326, %v1568
  %v1570 = vsub.f32 1.0, %v1569
  %v1571 = vmul.f32 %v1568, %v1570
  %v1572 = vadd.f32 %v1568, %v1571
  %vm1573 = vweird.f32 %v1326
  %vm1574 = vweird.f32 %v1568
  %vm1575 = vmor %vm1573, %vm1574
  %v1576 = vsel %vm1575, %v1568, %v1572
  %v1577 = vand.u32 2147483647, %v1326
  %vm1578 = vcmp.eq.f32.partialorder %v1577, 8.507059e+37
  %v1579 = vand.u32 %v1326, 2147483648
  %v1580 = vor.u32 1.1754944e-38, %v1579
  %v1581 = vsel %vm1578, %v1580, %v1576
  %v1582 = vmul.f32 1.0, %v1581
  %v1583 = vrcp.pop %v1327
  %v1584 = vmul.f32 %v1327, %v1583
  %v1585 = vsub.f32 1.0, %v1584
  %v1586 = vmul.f32 %v1583, %v1585
  %v1587 = vadd.f32 %v1583, %v1586
  %vm1588 = vweird.f32 %v1327
  %vm1589 = vweird.f32 %v1583
  %vm1590 = vmor %vm1588, %vm1589
  %v1591 = vsel %vm1590, %v1583, %v1587
  %v1592 = vand.u32 2147483647, %v1327
  %vm1593 = vcmp.eq.f32.partialorder %v1592, 8.507059e+37
  %v1594 = vand.u32 %v1327, 2147483648
  %v1595 = vor.u32 1.1754944e-38, %v1594
  %v1596 = vsel %vm1593, %v1595, %v1591
  %v1597 = vmul.f32 1.0, %v1596
  %v1598 = vrcp.pop %v1328
  %v1599 = vmul.f32 %v1328, %v1598
  %v1600 = vsub.f32 1.0, %v1599
  %v1601 = vmul.f32 %v1598, %v1600
  %v1602 = vadd.f32 %v1598, %v1601
  %vm1603 = vweird.f32 %v1328
  %vm1604 = vweird.f32 %v1598
  %vm1605 = vmor %vm1603, %vm1604
  %v1606 = vsel %vm1605, %v1598, %v1602
  %v1607 = vand.u32 2147483647, %v1328
  %vm1608 = vcmp.eq.f32.partialorder %v1607, 8.507059e+37
  %v1609 = vand.u32 %v1328, 2147483648
  %v1610 = vor.u32 1.1754944e-38, %v1609
  %v1611 = vsel %vm1608, %v1610, %v1606
  %v1612 = vmul.f32 1.0, %v1611
  %v1613 = vrcp.pop %v1329
  %v1614 = vmul.f32 %v1329, %v1613
  %v1615 = vsub.f32 1.0, %v1614
  %v1616 = vmul.f32 %v1613, %v1615
  %v1617 = vadd.f32 %v1613, %v1616
  %vm1618 = vweird.f32 %v1329
  %vm1619 = vweird.f32 %v1613
  %vm1620 = vmor %vm1618, %vm1619
  %v1621 = vsel %vm1620, %v1613, %v1617
  %v1622 = vand.u32 2147483647, %v1329
  %vm1623 = vcmp.eq.f32.partialorder %v1622, 8.507059e+37
  %v1624 = vand.u32 %v1329, 2147483648
  %v1625 = vor.u32 1.1754944e-38, %v1624
  %v1626 = vsel %vm1623, %v1625, %v1621
  %v1627 = vmul.f32 1.0, %v1626
  %v1628 = vrcp.pop %v1330
  %v1629 = vmul.f32 %v1330, %v1628
  %v1630 = vsub.f32 1.0, %v1629
  %v1631 = vmul.f32 %v1628, %v1630
  %v1632 = vadd.f32 %v1628, %v1631
  %vm1633 = vweird.f32 %v1330
  %vm1634 = vweird.f32 %v1628
  %vm1635 = vmor %vm1633, %vm1634
  %v1636 = vsel %vm1635, %v1628, %v1632
  %v1637 = vand.u32 2147483647, %v1330
  %vm1638 = vcmp.eq.f32.partialorder %v1637, 8.507059e+37
  %v1639 = vand.u32 %v1330, 2147483648
  %v1640 = vor.u32 1.1754944e-38, %v1639
  %v1641 = vsel %vm1638, %v1640, %v1636
  %v1642 = vmul.f32 1.0, %v1641
  %v1643 = vrcp.pop %v1331
  %v1644 = vmul.f32 %v1331, %v1643
  %v1645 = vsub.f32 1.0, %v1644
  %v1646 = vmul.f32 %v1643, %v1645
  %v1647 = vadd.f32 %v1643, %v1646
  %vm1648 = vweird.f32 %v1331
  %vm1649 = vweird.f32 %v1643
  %vm1650 = vmor %vm1648, %vm1649
  %v1651 = vsel %vm1650, %v1643, %v1647
  %v1652 = vand.u32 2147483647, %v1331
  %vm1653 = vcmp.eq.f32.partialorder %v1652, 8.507059e+37
  %v1654 = vand.u32 %v1331, 2147483648
  %v1655 = vor.u32 1.1754944e-38, %v1654
  %v1656 = vsel %vm1653, %v1655, %v1651
  %v1657 = vmul.f32 1.0, %v1656
  %v1658 = vrcp.pop %v1332
  %v1659 = vmul.f32 %v1332, %v1658
  %v1660 = vsub.f32 1.0, %v1659
  %v1661 = vmul.f32 %v1658, %v1660
  %v1662 = vadd.f32 %v1658, %v1661
  %vm1663 = vweird.f32 %v1332
  %vm1664 = vweird.f32 %v1658
  %vm1665 = vmor %vm1663, %vm1664
  %v1666 = vsel %vm1665, %v1658, %v1662
  %v1667 = vand.u32 2147483647, %v1332
  %vm1668 = vcmp.eq.f32.partialorder %v1667, 8.507059e+37
  %v1669 = vand.u32 %v1332, 2147483648
  %v1670 = vor.u32 1.1754944e-38, %v1669
  %v1671 = vsel %vm1668, %v1670, %v1666
  %v1672 = vmul.f32 1.0, %v1671
  %v1673 = vrcp.pop %v1333
  %v1674 = vmul.f32 %v1333, %v1673
  %v1675 = vsub.f32 1.0, %v1674
  %v1676 = vmul.f32 %v1673, %v1675
  %v1677 = vadd.f32 %v1673, %v1676
  %vm1678 = vweird.f32 %v1333
  %vm1679 = vweird.f32 %v1673
  %vm1680 = vmor %vm1678, %vm1679
  %v1681 = vsel %vm1680, %v1673, %v1677
  %v1682 = vand.u32 2147483647, %v1333
  %vm1683 = vcmp.eq.f32.partialorder %v1682, 8.507059e+37
  %v1684 = vand.u32 %v1333, 2147483648
  %v1685 = vor.u32 1.1754944e-38, %v1684
  %v1686 = vsel %vm1683, %v1685, %v1681
  %v1687 = vmul.f32 1.0, %v1686
  %v1688 = vrcp.pop %v1334
  %v1689 = vmul.f32 %v1334, %v1688
  %v1690 = vsub.f32 1.0, %v1689
  %v1691 = vmul.f32 %v1688, %v1690
  %v1692 = vadd.f32 %v1688, %v1691
  %vm1693 = vweird.f32 %v1334
  %vm1694 = vweird.f32 %v1688
  %vm1695 = vmor %vm1693, %vm1694
  %v1696 = vsel %vm1695, %v1688, %v1692
  %v1697 = vand.u32 2147483647, %v1334
  %vm1698 = vcmp.eq.f32.partialorder %v1697, 8.507059e+37
  %v1699 = vand.u32 %v1334, 2147483648
  %v1700 = vor.u32 1.1754944e-38, %v1699
  %v1701 = vsel %vm1698, %v1700, %v1696
  %v1702 = vmul.f32 1.0, %v1701
  %v1703 = vrcp.pop %v1335
  %v1704 = vmul.f32 %v1335, %v1703
  %v1705 = vsub.f32 1.0, %v1704
  %v1706 = vmul.f32 %v1703, %v1705
  %v1707 = vadd.f32 %v1703, %v1706
  %vm1708 = vweird.f32 %v1335
  %vm1709 = vweird.f32 %v1703
  %vm1710 = vmor %vm1708, %vm1709
  %v1711 = vsel %vm1710, %v1703, %v1707
  %v1712 = vand.u32 2147483647, %v1335
  %vm1713 = vcmp.eq.f32.partialorder %v1712, 8.507059e+37
  %v1714 = vand.u32 %v1335, 2147483648
  %v1715 = vor.u32 1.1754944e-38, %v1714
  %v1716 = vsel %vm1713, %v1715, %v1711
  %v1717 = vmul.f32 1.0, %v1716
  %v1718 = vrcp.pop %v1336
  %v1719 = vmul.f32 %v1336, %v1718
  %v1720 = vsub.f32 1.0, %v1719
  %v1721 = vmul.f32 %v1718, %v1720
  %v1722 = vadd.f32 %v1718, %v1721
  %vm1723 = vweird.f32 %v1336
  %vm1724 = vweird.f32 %v1718
  %vm1725 = vmor %vm1723, %vm1724
  %v1726 = vsel %vm1725, %v1718, %v1722
  %v1727 = vand.u32 2147483647, %v1336
  %vm1728 = vcmp.eq.f32.partialorder %v1727, 8.507059e+37
  %v1729 = vand.u32 %v1336, 2147483648
  %v1730 = vor.u32 1.1754944e-38, %v1729
  %v1731 = vsel %vm1728, %v1730, %v1726
  %v1732 = vmul.f32 1.0, %v1731
  %v1733 = vrcp.pop %v1337
  %v1734 = vmul.f32 %v1337, %v1733
  %v1735 = vsub.f32 1.0, %v1734
  %v1736 = vmul.f32 %v1733, %v1735
  %v1737 = vadd.f32 %v1733, %v1736
  %vm1738 = vweird.f32 %v1337
  %vm1739 = vweird.f32 %v1733
  %vm1740 = vmor %vm1738, %vm1739
  %v1741 = vsel %vm1740, %v1733, %v1737
  %v1742 = vand.u32 2147483647, %v1337
  %vm1743 = vcmp.eq.f32.partialorder %v1742, 8.507059e+37
  %v1744 = vand.u32 %v1337, 2147483648
  %v1745 = vor.u32 1.1754944e-38, %v1744
  %v1746 = vsel %vm1743, %v1745, %v1741
  %v1747 = vmul.f32 1.0, %v1746
  %v1748 = vrcp.pop %v1338
  %v1749 = vmul.f32 %v1338, %v1748
  %v1750 = vsub.f32 1.0, %v1749
  %v1751 = vmul.f32 %v1748, %v1750
  %v1752 = vadd.f32 %v1748, %v1751
  %vm1753 = vweird.f32 %v1338
  %vm1754 = vweird.f32 %v1748
  %vm1755 = vmor %vm1753, %vm1754
  %v1756 = vsel %vm1755, %v1748, %v1752
  %v1757 = vand.u32 2147483647, %v1338
  %vm1758 = vcmp.eq.f32.partialorder %v1757, 8.507059e+37
  %v1759 = vand.u32 %v1338, 2147483648
  %v1760 = vor.u32 1.1754944e-38, %v1759
  %v1761 = vsel %vm1758, %v1760, %v1756
  %v1762 = vmul.f32 1.0, %v1761
  %v1763 = vrcp.pop %v1339
  %v1764 = vmul.f32 %v1339, %v1763
  %v1765 = vsub.f32 1.0, %v1764
  %v1766 = vmul.f32 %v1763, %v1765
  %v1767 = vadd.f32 %v1763, %v1766
  %vm1768 = vweird.f32 %v1339
  %vm1769 = vweird.f32 %v1763
  %vm1770 = vmor %vm1768, %vm1769
  %v1771 = vsel %vm1770, %v1763, %v1767
  %v1772 = vand.u32 2147483647, %v1339
  %vm1773 = vcmp.eq.f32.partialorder %v1772, 8.507059e+37
  %v1774 = vand.u32 %v1339, 2147483648
  %v1775 = vor.u32 1.1754944e-38, %v1774
  %v1776 = vsel %vm1773, %v1775, %v1771
  %v1777 = vmul.f32 1.0, %v1776
  %v1778 = vrcp.pop %v1340
  %v1779 = vmul.f32 %v1340, %v1778
  %v1780 = vsub.f32 1.0, %v1779
  %v1781 = vmul.f32 %v1778, %v1780
  %v1782 = vadd.f32 %v1778, %v1781
  %vm1783 = vweird.f32 %v1340
  %vm1784 = vweird.f32 %v1778
  %vm1785 = vmor %vm1783, %vm1784
  %v1786 = vsel %vm1785, %v1778, %v1782
  %v1787 = vand.u32 2147483647, %v1340
  %vm1788 = vcmp.eq.f32.partialorder %v1787, 8.507059e+37
  %v1789 = vand.u32 %v1340, 2147483648
  %v1790 = vor.u32 1.1754944e-38, %v1789
  %v1791 = vsel %vm1788, %v1790, %v1786
  %v1792 = vmul.f32 1.0, %v1791
  %v1793 = vrcp.pop %v1341
  %v1794 = vmul.f32 %v1341, %v1793
  %v1795 = vsub.f32 1.0, %v1794
  %v1796 = vmul.f32 %v1793, %v1795
  %v1797 = vadd.f32 %v1793, %v1796
  %vm1798 = vweird.f32 %v1341
  %vm1799 = vweird.f32 %v1793
  %vm1800 = vmor %vm1798, %vm1799
  %v1801 = vsel %vm1800, %v1793, %v1797
  %v1802 = vand.u32 2147483647, %v1341
  %vm1803 = vcmp.eq.f32.partialorder %v1802, 8.507059e+37
  %v1804 = vand.u32 %v1341, 2147483648
  %v1805 = vor.u32 1.1754944e-38, %v1804
  %v1806 = vsel %vm1803, %v1805, %v1801
  %v1807 = vmul.f32 1.0, %v1806
  %v1808 = vrcp.pop %v1342
  %v1809 = vmul.f32 %v1342, %v1808
  %v1810 = vsub.f32 1.0, %v1809
  %v1811 = vmul.f32 %v1808, %v1810
  %v1812 = vadd.f32 %v1808, %v1811
  %vm1813 = vweird.f32 %v1342
  %vm1814 = vweird.f32 %v1808
  %vm1815 = vmor %vm1813, %vm1814
  %v1816 = vsel %vm1815, %v1808, %v1812
  %v1817 = vand.u32 2147483647, %v1342
  %vm1818 = vcmp.eq.f32.partialorder %v1817, 8.507059e+37
  %v1819 = vand.u32 %v1342, 2147483648
  %v1820 = vor.u32 1.1754944e-38, %v1819
  %v1821 = vsel %vm1818, %v1820, %v1816
  %v1822 = vmul.f32 1.0, %v1821
  %1823 = vst.msk [vmem:[%s12] sm:$0xff] %vm74, %v1357
  %1824 = vst.msk [vmem:[%s12 + $0x8] sm:$0xff] %vm74, %v1372
  %1825 = vst.msk [vmem:[%s12 + $0x10] sm:$0xff] %vm74, %v1387
  %1826 = vst.msk [vmem:[%s12 + $0x18] sm:$0xff] %vm74, %v1402
  %1827 = vst.msk [vmem:[%s12 + $0x20] sm:$0xff] %vm74, %v1417
  %1828 = vst.msk [vmem:[%s12 + $0x28] sm:$0xff] %vm74, %v1432
  %1829 = vst.msk [vmem:[%s12 + $0x30] sm:$0xff] %vm74, %v1447
  %1830 = vst.msk [vmem:[%s12 + $0x38] sm:$0xff] %vm74, %v1462
  %1831 = vst.msk [vmem:[%s12 + $0x40] sm:$0xff] %vm74, %v1477
  %1832 = vst.msk [vmem:[%s12 + $0x48] sm:$0xff] %vm74, %v1492
  %1833 = vst.msk [vmem:[%s12 + $0x50] sm:$0xff] %vm74, %v1507
  %1834 = vst.msk [vmem:[%s12 + $0x58] sm:$0xff] %vm74, %v1522
  %1835 = vst.msk [vmem:[%s12 + $0x60] sm:$0xff] %vm74, %v1537
  %1836 = vst.msk [vmem:[%s12 + $0x68] sm:$0xff] %vm74, %v1552
  %1837 = vst.msk [vmem:[%s12 + $0x70] sm:$0xff] %vm74, %v1567
  %1838 = vst.msk [vmem:[%s12 + $0x78] sm:$0xff] %vm74, %v1582
  %1839 = vst.msk [vmem:[%s12 + $0x80] sm:$0xff] %vm74, %v1597
  %1840 = vst.msk [vmem:[%s12 + $0x88] sm:$0xff] %vm74, %v1612
  %1841 = vst.msk [vmem:[%s12 + $0x90] sm:$0xff] %vm74, %v1627
  %1842 = vst.msk [vmem:[%s12 + $0x98] sm:$0xff] %vm74, %v1642
  %1843 = vst.msk [vmem:[%s12 + $0xa0] sm:$0xff] %vm74, %v1657
  %1844 = vst.msk [vmem:[%s12 + $0xa8] sm:$0xff] %vm74, %v1672
  %1845 = vst.msk [vmem:[%s12 + $0xb0] sm:$0xff] %vm74, %v1687
  %1846 = vst.msk [vmem:[%s12 + $0xb8] sm:$0xff] %vm74, %v1702
  %1847 = vst.msk [vmem:[%s12 + $0xc0] sm:$0xff] %vm74, %v1717
  %1848 = vst.msk [vmem:[%s12 + $0xc8] sm:$0xff] %vm74, %v1732
  %1849 = vst.msk [vmem:[%s12 + $0xd0] sm:$0xff] %vm74, %v1747
  %1850 = vst.msk [vmem:[%s12 + $0xd8] sm:$0xff] %vm74, %v1762
  %1851 = vst.msk [vmem:[%s12 + $0xe0] sm:$0xff] %vm74, %v1777
  %1852 = vst.msk [vmem:[%s12 + $0xe8] sm:$0xff] %vm74, %v1792
  %1853 = vst.msk [vmem:[%s12 + $0xf0] sm:$0xff] %vm74, %v1807
  %1854 = vst.msk [vmem:[%s12 + $0xf8] sm:$0xff] %vm74, %v1822
  // Predicated region
  $region42: #{tpu_custom_call.1} parent=0 // pred_check
    _
  $region43: #{tpu_custom_call.1} parent=0 // pred_check_branch
    %1856 = sbr.rel (0) target = $region45
  $region44: #{tpu_custom_call.1} parent=0 // pred_region
    _
  $region45: #{tpu_custom_call.1} parent=0 // pred_fallthru
    _
  // Predicated region
  $region46: #{tpu_custom_call.1} parent=0 // pred_check
    _
  $region47: #{tpu_custom_call.1} parent=0 // pred_check_branch
    %1858 = sbr.rel (0) target = $region49
  $region48: #{tpu_custom_call.1} parent=0 // pred_region
    _
  $region49: #{tpu_custom_call.1} parent=0 // pred_fallthru
    _
  // Predicated region
  $region50: #{tpu_custom_call.1} parent=0 // pred_check
    _
  $region51: #{tpu_custom_call.1} parent=0 // pred_check_branch
    %1860 = sbr.rel (0) target = $region53
  $region52: #{tpu_custom_call.1} parent=0 // pred_region
    _
  $region53: #{tpu_custom_call.1} parent=0 // pred_fallthru
    _
  // Predicated region
  $region54: #{tpu_custom_call.1} parent=0 // pred_check
    _
  $region55: #{tpu_custom_call.1} parent=0 // pred_check_branch
    %1862 = sbr.rel (0) target = $region57
  $region56: #{tpu_custom_call.1} parent=0 // pred_region
    _
  $region57: #{tpu_custom_call.1} parent=0 // pred_fallthru
    _
  // Predicated region
  $region58: #{tpu_custom_call.1} parent=0 // pred_check
    _
  $region59: #{tpu_custom_call.1} parent=0 // pred_check_branch
    %1864 = sbr.rel (0) target = $region61
  $region60: #{tpu_custom_call.1} parent=0 // pred_region
    _
  $region61: #{tpu_custom_call.1} parent=0 // pred_fallthru
    _
  // Predicated region
  $region62: #{tpu_custom_call.1} parent=0 // pred_check
    _
  $region63: #{tpu_custom_call.1} parent=0 // pred_check_branch
    %1866 = sbr.rel (0) target = $region65
  $region64: #{tpu_custom_call.1} parent=0 // pred_region
    _
  $region65: #{tpu_custom_call.1} parent=0 // pred_fallthru
    _

</llo_original>
